<compile_context>
chip_gen: v5e
topology: v5e:2x2
jax: 0.10.0
libtpu: 0.0.40
codegen_flags: <defaults>
</compile_context>

<pallas_src>
import math

import jax
import jax.numpy as jnp
from jax.experimental import pallas as pl
from jax.experimental.pallas import tpu as pltpu

# ----------------------------- config ---------------------------------------
B = 2           # batch
S_DEC = 8       # decoder sequence length
S_ENC = 16      # encoder sequence length
D_E = 32        # embedding dim (args.d_e)
D_Q = 16        # per-head dim (args.d_q)
H = 2           # num heads (args.num_heads)
HDQ = H * D_Q   # 32
D_H = 64        # FFN hidden dim (args.d_h)
LN_EPS = 1e-5   # PyTorch nn.LayerNorm default
INV_SQRT_DQ = 1.0 / math.sqrt(D_Q)   # 0.25 (exact power of two)


def _layernorm(x, gamma, beta, eps=LN_EPS):
    mu = jnp.mean(x, axis=-1, keepdims=True)
    var = jnp.mean((x - mu) ** 2, axis=-1, keepdims=True)
    return (x - mu) * jax.lax.rsqrt(var + eps) * gamma + beta


# ----------------------------- kernel ---------------------------------------
def decoder_layer_kernel(
    dec_ref, enc_ref, smask_ref, cmask_ref,
    wqkv_ref, bqkv_ref, wm_ref, w1_ref, b1_ref, w2_ref, vec_ref,
    o_ref,
):
    # One batch element per grid step; leading batch dim is squeezed.
    x_dec = dec_ref[...]       # (S_DEC, D_E)
    x_enc = enc_ref[...]       # (S_ENC, D_E)
    smask = smask_ref[...]     # (S_DEC, S_DEC) float, 1.0 == masked
    cmask = cmask_ref[...]     # (S_DEC, S_ENC) float, 1.0 == masked

    wqkv = wqkv_ref[...]       # (D_E, 3*HDQ) -> [Wq | Wk | Wv]
    bqkv = bqkv_ref[...]       # (1, 3*HDQ)
    wm = wm_ref[...]           # (HDQ, D_E)
    w1 = w1_ref[...]           # (D_E, D_H)
    b1 = b1_ref[...]           # (1, D_H)
    w2 = w2_ref[...]           # (D_H, D_E)
    vec = vec_ref[...]         # (6, D_E): bm, g_attn, be_attn, b2, g_ffn, be_ffn
    bm, g_attn, be_attn = vec[0:1], vec[1:2], vec[2:3]
    b2, g_ffn, be_ffn = vec[3:4], vec[4:5], vec[5:6]

    def mha(pre_q, pre_kv, mask):
        # fused QKV projection; reuse the query-side result when pre_q == pre_kv
        qkv_q = jnp.dot(pre_q, wqkv, preferred_element_type=jnp.float32) + bqkv
        if pre_kv is pre_q:
            qkv_kv = qkv_q
        else:
            qkv_kv = jnp.dot(pre_kv, wqkv,
                             preferred_element_type=jnp.float32) + bqkv
        # fold the 1/sqrt(d_q) scale into q (0.25 is exact in fp32)
        q_all = qkv_q[:, 0:HDQ] * INV_SQRT_DQ          # (S_q, HDQ)
        k_all = qkv_kv[:, HDQ:2 * HDQ]                 # (S_kv, HDQ)
        v_all = qkv_kv[:, 2 * HDQ:3 * HDQ]             # (S_kv, HDQ)

        # statically unrolled heads: lane slices + 2-D dots (no relayouts)
        ctx_heads = []
        for h in range(H):
            sl = slice(h * D_Q, (h + 1) * D_Q)
            qh, kh, vh = q_all[:, sl], k_all[:, sl], v_all[:, sl]
            scores = jax.lax.dot_general(
                qh, kh, (((1,), (1,)), ((), ())),
                preferred_element_type=jnp.float32)     # (S_q, S_kv)
            scores = jnp.where(mask > 0.5, jnp.float32(-1e9), scores)
            m = jnp.max(scores, axis=-1, keepdims=True)
            e = jnp.exp(scores - m)
            # exact division kept for the tight correctness check;
            # pl.reciprocal(..., approx=True) is the free EUP alternative.
            p = e / jnp.sum(e, axis=-1, keepdims=True)
            ctx_heads.append(
                jnp.dot(p, vh, preferred_element_type=jnp.float32))
        ctx = jnp.concatenate(ctx_heads, axis=-1)       # (S_q, HDQ)
        ctx = jnp.dot(ctx, wm, preferred_element_type=jnp.float32) + bm
        return _layernorm(pre_q + ctx, g_attn, be_attn)

    # spec forward: self.multiheadattn used for BOTH calls (shared weights)
    y1 = mha(x_dec, x_dec, smask)    # masked self-attention
    y2 = mha(y1, x_enc, cmask)       # cross-attention with encoder output

    # position-wise FFN (1x1 convs == per-position Linear) + residual + LN
    h1 = jnp.maximum(
        jnp.dot(y2, w1, preferred_element_type=jnp.float32) + b1, 0.0)
    h2 = jnp.dot(h1, w2, preferred_element_type=jnp.float32) + b2
    o_ref[...] = _layernorm(y2 + h2, g_ffn, be_ffn).astype(o_ref.dtype)


# ----------------------------- wrapper ---------------------------------------
def _replicated_spec(arr):
    nd = arr.ndim
    return pl.BlockSpec(arr.shape, lambda b, _nd=nd: (0,) * _nd)


def decoder_layer(decoder_i, encoder_o, self_attn_mask, cross_attn_mask, params):
    """decoder_i: (B,S_DEC,D_E); encoder_o: (B,S_ENC,D_E); masks: 1.0 == masked."""
    vec_slab = jnp.concatenate(
        [params["bm"], params["g_attn"], params["be_attn"],
         params["b2"], params["g_ffn"], params["be_ffn"]], axis=0)  # (6, D_E)

    weights = [params["wqkv"], params["bqkv"], params["wm"],
               params["w1"], params["b1"], params["w2"], vec_slab]

    in_specs = [
        pl.BlockSpec((None, S_DEC, D_E), lambda b: (b, 0, 0)),    # decoder_i
        pl.BlockSpec((None, S_ENC, D_E), lambda b: (b, 0, 0)),    # encoder_o
        pl.BlockSpec((None, S_DEC, S_DEC), lambda b: (b, 0, 0)),  # self mask
        pl.BlockSpec((None, S_DEC, S_ENC), lambda b: (b, 0, 0)),  # cross mask
    ] + [_replicated_spec(w) for w in weights]

    # grid=(B,) + "parallel": the 2 batch rows shard across v7x's 2 TCs.
    # On single-TC v5e/v6e the grid is a 2-step serial loop (overhead is tiny).
    return pl.pallas_call(
        decoder_layer_kernel,
        out_shape=jax.ShapeDtypeStruct((B, S_DEC, D_E), jnp.float32),
        grid_spec=pltpu.PrefetchScalarGridSpec(
            num_scalar_prefetch=0,
            grid=(B,),
            in_specs=in_specs,
            out_specs=pl.BlockSpec((None, S_DEC, D_E), lambda b: (b, 0, 0)),
        ),
        compiler_params=pltpu.CompilerParams(
            dimension_semantics=("parallel",)),
    )(decoder_i, encoder_o, self_attn_mask, cross_attn_mask, *weights)


# ----------------------------- reference (plain JAX) -------------------------
_HIGH = jax.lax.Precision.HIGHEST   # match the f32 kernel (avoid bf16 passes)


def _mha_ref(pre_q, pre_kv, mask, p):
    wq, wk, wv = (p["wqkv"][:, 0:HDQ], p["wqkv"][:, HDQ:2 * HDQ],
                  p["wqkv"][:, 2 * HDQ:3 * HDQ])
    bq, bk, bv = (p["bqkv"][:, 0:HDQ], p["bqkv"][:, HDQ:2 * HDQ],
                  p["bqkv"][:, 2 * HDQ:3 * HDQ])
    bsz, q_len, _ = pre_q.shape
    k_len = pre_kv.shape[1]
    q = (jnp.dot(pre_q, wq, precision=_HIGH) + bq).reshape(
        bsz, q_len, H, D_Q).transpose(0, 2, 1, 3)
    k = (jnp.dot(pre_kv, wk, precision=_HIGH) + bk).reshape(
        bsz, k_len, H, D_Q).transpose(0, 2, 1, 3)
    v = (jnp.dot(pre_kv, wv, precision=_HIGH) + bv).reshape(
        bsz, k_len, H, D_Q).transpose(0, 2, 1, 3)
    scores = jnp.einsum('bhqd,bhkd->bhqk', q, k,
                        precision=_HIGH) / math.sqrt(D_Q)
    scores = jnp.where(mask[:, None] > 0.5, -1e9, scores)
    attn = jax.nn.softmax(scores, axis=-1)
    ctx = jnp.einsum('bhqk,bhkd->bhqd', attn, v, precision=_HIGH)
    ctx = ctx.transpose(0, 2, 1, 3).reshape(bsz, q_len, HDQ)
    ctx = jnp.dot(ctx, p["wm"], precision=_HIGH) + p["bm"]
    return _layernorm(pre_q + ctx, p["g_attn"], p["be_attn"])


def decoder_layer_ref(dec, enc, smask, cmask, p):
    y1 = _mha_ref(dec, dec, smask, p)
    y2 = _mha_ref(y1, enc, cmask, p)
    h1 = jnp.maximum(jnp.dot(y2, p["w1"], precision=_HIGH) + p["b1"], 0.0)
    h2 = jnp.dot(h1, p["w2"], precision=_HIGH) + p["b2"]
    return _layernorm(y2 + h2, p["g_ffn"], p["be_ffn"])


# ----------------------------- params ----------------------------------------
def make_params(key):
    ks = jax.random.split(key, 12)
    s = 0.1
    n = lambda k, shape: s * jax.random.normal(k, shape, jnp.float32)
    return {
        # shared MultiHeadAttn (used by both attention calls, per spec forward)
        "wqkv": n(ks[0], (D_E, 3 * HDQ)),       # [Wq | Wk | Wv]
        "bqkv": n(ks[1], (1, 3 * HDQ)),
        "wm":   n(ks[2], (HDQ, D_E)),
        "bm":   n(ks[3], (1, D_E)),
        "g_attn":  1.0 + n(ks[4], (1, D_E)),
        "be_attn": n(ks[5], (1, D_E)),
        # PosiFeedForward: Conv1d(d_e,d_h,1)/Conv1d(d_h,d_e,1) == Linear weights
        "w1": n(ks[6], (D_E, D_H)),
        "b1": n(ks[7], (1, D_H)),
        "w2": n(ks[8], (D_H, D_E)),
        "b2": n(ks[9], (1, D_E)),
        "g_ffn":  1.0 + n(ks[10], (1, D_E)),
        "be_ffn": n(ks[11], (1, D_E)),
    }


# ----------------------------- main ------------------------------------------
if __name__ == "__main__":
    key = jax.random.PRNGKey(0)
    k_dec, k_enc, k_p = jax.random.split(key, 3)

    decoder_i = jax.random.normal(k_dec, (B, S_DEC, D_E), jnp.float32)
    encoder_o = jax.random.normal(k_enc, (B, S_ENC, D_E), jnp.float32)

    # causal self-attention mask (1.0 == masked), shared across the batch
    pos = jnp.arange(S_DEC)
    self_attn_mask = jnp.broadcast_to(
        (pos[None, :] > pos[:, None]).astype(jnp.float32)[None],
        (B, S_DEC, S_DEC))

    # cross-attention mask: encoder padding (batch 1 keeps only 12 positions)
    enc_valid = jnp.array([S_ENC, S_ENC - 4])
    kpos = jnp.arange(S_ENC)
    cross_attn_mask = jnp.broadcast_to(
        (kpos[None, None, :] >= enc_valid[:, None, None]).astype(jnp.float32),
        (B, S_DEC, S_ENC))

    params = make_params(k_p)

    out = decoder_layer(decoder_i, encoder_o, self_attn_mask,
                        cross_attn_mask, params)
    out = jax.block_until_ready(out)

    ref = decoder_layer_ref(decoder_i, encoder_o, self_attn_mask,
                            cross_attn_mask, params)
    ref = jax.block_until_ready(ref)

    assert out.shape == (B, S_DEC, D_E)
    max_err = float(jnp.max(jnp.abs(out - ref)))
    assert max_err < 2e-3, f"mismatch vs JAX reference: max abs err = {max_err}"
    print("KERNEL_OK")
</pallas_src>

<mosaic_0001>
module attributes {stable_mosaic.version = 11 : i64} {
  func.func @decoder_layer_kernel(%arg0: i32, %arg1: memref<1x8x32xf32, #tpu.memory_space<vmem>>, %arg2: memref<1x16x32xf32, #tpu.memory_space<vmem>>, %arg3: memref<1x8x8xf32, #tpu.memory_space<vmem>>, %arg4: memref<1x8x16xf32, #tpu.memory_space<vmem>>, %arg5: memref<32x96xf32, #tpu.memory_space<vmem>>, %arg6: memref<1x96xf32, #tpu.memory_space<vmem>>, %arg7: memref<32x32xf32, #tpu.memory_space<vmem>>, %arg8: memref<32x64xf32, #tpu.memory_space<vmem>>, %arg9: memref<1x64xf32, #tpu.memory_space<vmem>>, %arg10: memref<64x32xf32, #tpu.memory_space<vmem>>, %arg11: memref<6x32xf32, #tpu.memory_space<vmem>>, %arg12: memref<1x8x32xf32, #tpu.memory_space<vmem>>) attributes {dimension_semantics = [#tpu.dimension_semantics<parallel>], iteration_bounds = array<i64: 2>, scalar_prefetch = 0 : i64, scratch_operands = 0 : i64, tpu.core_type = #tpu.core_type<tc>, window_params = [{transform_indices = @transform_0, window_bounds = array<i64: 1, 8, 32>}, {transform_indices = @transform_1, window_bounds = array<i64: 1, 16, 32>}, {transform_indices = @transform_2, window_bounds = array<i64: 1, 8, 8>}, {transform_indices = @transform_3, window_bounds = array<i64: 1, 8, 16>}, {pipeline_mode = #tpu.pipeline_mode<synchronous>, transform_indices = @transform_4, window_bounds = array<i64: 32, 96>}, {pipeline_mode = #tpu.pipeline_mode<synchronous>, transform_indices = @transform_5, window_bounds = array<i64: 1, 96>}, {pipeline_mode = #tpu.pipeline_mode<synchronous>, transform_indices = @transform_6, window_bounds = array<i64: 32, 32>}, {pipeline_mode = #tpu.pipeline_mode<synchronous>, transform_indices = @transform_7, window_bounds = array<i64: 32, 64>}, {pipeline_mode = #tpu.pipeline_mode<synchronous>, transform_indices = @transform_8, window_bounds = array<i64: 1, 64>}, {pipeline_mode = #tpu.pipeline_mode<synchronous>, transform_indices = @transform_9, window_bounds = array<i64: 64, 32>}, {pipeline_mode = #tpu.pipeline_mode<synchronous>, transform_indices = @transform_10, window_bounds = array<i64: 6, 32>}, {transform_indices = @transform_11, window_bounds = array<i64: 1, 8, 32>}]} {
    %c0 = arith.constant 0 : index
    %c0_0 = arith.constant 0 : index
    %c0_1 = arith.constant 0 : index
    %0 = vector.load %arg1[%c0, %c0_0, %c0_1] : memref<1x8x32xf32, #tpu.memory_space<vmem>>, vector<1x8x32xf32>
    %1 = vector.shape_cast %0 : vector<1x8x32xf32> to vector<8x32xf32>
    %c0_2 = arith.constant 0 : index
    %c0_3 = arith.constant 0 : index
    %c0_4 = arith.constant 0 : index
    %2 = vector.load %arg2[%c0_2, %c0_3, %c0_4] : memref<1x16x32xf32, #tpu.memory_space<vmem>>, vector<1x16x32xf32>
    %3 = vector.shape_cast %2 : vector<1x16x32xf32> to vector<16x32xf32>
    %c0_5 = arith.constant 0 : index
    %c0_6 = arith.constant 0 : index
    %c0_7 = arith.constant 0 : index
    %4 = vector.load %arg3[%c0_5, %c0_6, %c0_7] : memref<1x8x8xf32, #tpu.memory_space<vmem>>, vector<1x8x8xf32>
    %5 = vector.shape_cast %4 : vector<1x8x8xf32> to vector<8x8xf32>
    %c0_8 = arith.constant 0 : index
    %c0_9 = arith.constant 0 : index
    %c0_10 = arith.constant 0 : index
    %6 = vector.load %arg4[%c0_8, %c0_9, %c0_10] : memref<1x8x16xf32, #tpu.memory_space<vmem>>, vector<1x8x16xf32>
    %7 = vector.shape_cast %6 : vector<1x8x16xf32> to vector<8x16xf32>
    %c0_11 = arith.constant 0 : index
    %c0_12 = arith.constant 0 : index
    %8 = vector.load %arg5[%c0_11, %c0_12] : memref<32x96xf32, #tpu.memory_space<vmem>>, vector<32x96xf32>
    %c0_13 = arith.constant 0 : index
    %c0_14 = arith.constant 0 : index
    %9 = vector.load %arg6[%c0_13, %c0_14] : memref<1x96xf32, #tpu.memory_space<vmem>>, vector<1x96xf32>
    %c0_15 = arith.constant 0 : index
    %c0_16 = arith.constant 0 : index
    %10 = vector.load %arg7[%c0_15, %c0_16] : memref<32x32xf32, #tpu.memory_space<vmem>>, vector<32x32xf32>
    %c0_17 = arith.constant 0 : index
    %c0_18 = arith.constant 0 : index
    %11 = vector.load %arg8[%c0_17, %c0_18] : memref<32x64xf32, #tpu.memory_space<vmem>>, vector<32x64xf32>
    %c0_19 = arith.constant 0 : index
    %c0_20 = arith.constant 0 : index
    %12 = vector.load %arg9[%c0_19, %c0_20] : memref<1x64xf32, #tpu.memory_space<vmem>>, vector<1x64xf32>
    %c0_21 = arith.constant 0 : index
    %c0_22 = arith.constant 0 : index
    %13 = vector.load %arg10[%c0_21, %c0_22] : memref<64x32xf32, #tpu.memory_space<vmem>>, vector<64x32xf32>
    %c0_23 = arith.constant 0 : index
    %c0_24 = arith.constant 0 : index
    %14 = vector.load %arg11[%c0_23, %c0_24] : memref<6x32xf32, #tpu.memory_space<vmem>>, vector<6x32xf32>
    %15 = vector.extract_strided_slice %14 {offsets = [0, 0], sizes = [1, 32], strides = [1, 1]} : vector<6x32xf32> to vector<1x32xf32>
    %16 = vector.extract_strided_slice %14 {offsets = [1, 0], sizes = [1, 32], strides = [1, 1]} : vector<6x32xf32> to vector<1x32xf32>
    %17 = vector.extract_strided_slice %14 {offsets = [2, 0], sizes = [1, 32], strides = [1, 1]} : vector<6x32xf32> to vector<1x32xf32>
    %18 = vector.extract_strided_slice %14 {offsets = [3, 0], sizes = [1, 32], strides = [1, 1]} : vector<6x32xf32> to vector<1x32xf32>
    %19 = vector.extract_strided_slice %14 {offsets = [4, 0], sizes = [1, 32], strides = [1, 1]} : vector<6x32xf32> to vector<1x32xf32>
    %20 = vector.extract_strided_slice %14 {offsets = [5, 0], sizes = [1, 32], strides = [1, 1]} : vector<6x32xf32> to vector<1x32xf32>
    %cst = arith.constant dense<0.000000e+00> : vector<8x96xf32>
    %21 = tpu.matmul %1, %8, %cst {dimension_numbers = #tpu.dot_dimension_numbers<[1], [0], [0], [1], [0, 0, 1, 1], [], []>} : vector<8x32xf32>, vector<32x96xf32>, vector<8x96xf32> -> vector<8x96xf32>
    %22 = vector.broadcast %9 : vector<1x96xf32> to vector<8x96xf32>
    %23 = arith.addf %21, %22 : vector<8x96xf32>
    %24 = vector.extract_strided_slice %23 {offsets = [0, 0], sizes = [8, 32], strides = [1, 1]} : vector<8x96xf32> to vector<8x32xf32>
    %cst_25 = arith.constant 2.500000e-01 : f32
    %25 = vector.broadcast %cst_25 : f32 to vector<8x32xf32>
    %26 = arith.mulf %24, %25 : vector<8x32xf32>
    %27 = vector.extract_strided_slice %23 {offsets = [0, 32], sizes = [8, 32], strides = [1, 1]} : vector<8x96xf32> to vector<8x32xf32>
    %28 = vector.extract_strided_slice %23 {offsets = [0, 64], sizes = [8, 32], strides = [1, 1]} : vector<8x96xf32> to vector<8x32xf32>
    %29 = vector.extract_strided_slice %26 {offsets = [0, 0], sizes = [8, 16], strides = [1, 1]} : vector<8x32xf32> to vector<8x16xf32>
    %30 = vector.extract_strided_slice %27 {offsets = [0, 0], sizes = [8, 16], strides = [1, 1]} : vector<8x32xf32> to vector<8x16xf32>
    %31 = vector.extract_strided_slice %28 {offsets = [0, 0], sizes = [8, 16], strides = [1, 1]} : vector<8x32xf32> to vector<8x16xf32>
    %cst_26 = arith.constant dense<0.000000e+00> : vector<8x8xf32>
    %32 = tpu.matmul %29, %30, %cst_26 {dimension_numbers = #tpu.dot_dimension_numbers<[1], [1], [0], [0], [0, 0, 1, 0], [], []>} : vector<8x16xf32>, vector<8x16xf32>, vector<8x8xf32> -> vector<8x8xf32>
    %cst_27 = arith.constant 5.000000e-01 : f32
    %33 = vector.broadcast %cst_27 : f32 to vector<8x8xf32>
    %34 = arith.cmpf ogt, %5, %33 : vector<8x8xf32>
    %cst_28 = arith.constant -1.000000e+09 : f32
    %35 = vector.broadcast %cst_28 : f32 to vector<8x8xf32>
    %36 = arith.select %34, %35, %32 : vector<8x8xi1>, vector<8x8xf32>
    %cst_29 = arith.constant dense<0xFF800000> : vector<8xf32>
    %37 = vector.multi_reduction <maximumf>, %36, %cst_29 [1] : vector<8x8xf32> to vector<8xf32>
    %38 = vector.shape_cast %37 : vector<8xf32> to vector<8x1xf32>
    %39 = vector.broadcast %38 : vector<8x1xf32> to vector<8x8xf32>
    %40 = arith.subf %36, %39 : vector<8x8xf32>
    %41 = math.exp %40 : vector<8x8xf32>
    %cst_30 = arith.constant dense<0.000000e+00> : vector<8xf32>
    %42 = vector.multi_reduction <add>, %41, %cst_30 [1] : vector<8x8xf32> to vector<8xf32>
    %43 = vector.shape_cast %42 : vector<8xf32> to vector<8x1xf32>
    %44 = vector.broadcast %43 : vector<8x1xf32> to vector<8x8xf32>
    %45 = arith.divf %41, %44 : vector<8x8xf32>
    %cst_31 = arith.constant dense<0.000000e+00> : vector<8x16xf32>
    %46 = tpu.matmul %45, %31, %cst_31 {dimension_numbers = #tpu.dot_dimension_numbers<[1], [0], [0], [1], [0, 0, 1, 1], [], []>} : vector<8x8xf32>, vector<8x16xf32>, vector<8x16xf32> -> vector<8x16xf32>
    %47 = vector.extract_strided_slice %26 {offsets = [0, 16], sizes = [8, 16], strides = [1, 1]} : vector<8x32xf32> to vector<8x16xf32>
    %48 = vector.extract_strided_slice %27 {offsets = [0, 16], sizes = [8, 16], strides = [1, 1]} : vector<8x32xf32> to vector<8x16xf32>
    %49 = vector.extract_strided_slice %28 {offsets = [0, 16], sizes = [8, 16], strides = [1, 1]} : vector<8x32xf32> to vector<8x16xf32>
    %cst_32 = arith.constant dense<0.000000e+00> : vector<8x8xf32>
    %50 = tpu.matmul %47, %48, %cst_32 {dimension_numbers = #tpu.dot_dimension_numbers<[1], [1], [0], [0], [0, 0, 1, 0], [], []>} : vector<8x16xf32>, vector<8x16xf32>, vector<8x8xf32> -> vector<8x8xf32>
    %cst_33 = arith.constant 5.000000e-01 : f32
    %51 = vector.broadcast %cst_33 : f32 to vector<8x8xf32>
    %52 = arith.cmpf ogt, %5, %51 : vector<8x8xf32>
    %cst_34 = arith.constant -1.000000e+09 : f32
    %53 = vector.broadcast %cst_34 : f32 to vector<8x8xf32>
    %54 = arith.select %52, %53, %50 : vector<8x8xi1>, vector<8x8xf32>
    %cst_35 = arith.constant dense<0xFF800000> : vector<8xf32>
    %55 = vector.multi_reduction <maximumf>, %54, %cst_35 [1] : vector<8x8xf32> to vector<8xf32>
    %56 = vector.shape_cast %55 : vector<8xf32> to vector<8x1xf32>
    %57 = vector.broadcast %56 : vector<8x1xf32> to vector<8x8xf32>
    %58 = arith.subf %54, %57 : vector<8x8xf32>
    %59 = math.exp %58 : vector<8x8xf32>
    %cst_36 = arith.constant dense<0.000000e+00> : vector<8xf32>
    %60 = vector.multi_reduction <add>, %59, %cst_36 [1] : vector<8x8xf32> to vector<8xf32>
    %61 = vector.shape_cast %60 : vector<8xf32> to vector<8x1xf32>
    %62 = vector.broadcast %61 : vector<8x1xf32> to vector<8x8xf32>
    %63 = arith.divf %59, %62 : vector<8x8xf32>
    %cst_37 = arith.constant dense<0.000000e+00> : vector<8x16xf32>
    %64 = tpu.matmul %63, %49, %cst_37 {dimension_numbers = #tpu.dot_dimension_numbers<[1], [0], [0], [1], [0, 0, 1, 1], [], []>} : vector<8x8xf32>, vector<8x16xf32>, vector<8x16xf32> -> vector<8x16xf32>
    %65 = tpu.concatenate %46, %64 in 1 : vector<8x16xf32>, vector<8x16xf32> -> vector<8x32xf32>
    %cst_38 = arith.constant dense<0.000000e+00> : vector<8x32xf32>
    %66 = tpu.matmul %65, %10, %cst_38 {dimension_numbers = #tpu.dot_dimension_numbers<[1], [0], [0], [1], [0, 0, 1, 1], [], []>} : vector<8x32xf32>, vector<32x32xf32>, vector<8x32xf32> -> vector<8x32xf32>
    %67 = vector.broadcast %15 : vector<1x32xf32> to vector<8x32xf32>
    %68 = arith.addf %66, %67 : vector<8x32xf32>
    %69 = arith.addf %1, %68 : vector<8x32xf32>
    %cst_39 = arith.constant dense<0.000000e+00> : vector<8xf32>
    %70 = vector.multi_reduction <add>, %69, %cst_39 [1] : vector<8x32xf32> to vector<8xf32>
    %71 = vector.shape_cast %70 : vector<8xf32> to vector<8x1xf32>
    %cst_40 = arith.constant 3.200000e+01 : f32
    %72 = vector.broadcast %cst_40 : f32 to vector<8x1xf32>
    %73 = arith.divf %71, %72 : vector<8x1xf32>
    %74 = vector.broadcast %73 : vector<8x1xf32> to vector<8x32xf32>
    %75 = arith.subf %69, %74 : vector<8x32xf32>
    %76 = arith.mulf %75, %75 : vector<8x32xf32>
    %cst_41 = arith.constant dense<0.000000e+00> : vector<8xf32>
    %77 = vector.multi_reduction <add>, %76, %cst_41 [1] : vector<8x32xf32> to vector<8xf32>
    %78 = vector.shape_cast %77 : vector<8xf32> to vector<8x1xf32>
    %cst_42 = arith.constant 3.200000e+01 : f32
    %79 = vector.broadcast %cst_42 : f32 to vector<8x1xf32>
    %80 = arith.divf %78, %79 : vector<8x1xf32>
    %81 = vector.broadcast %73 : vector<8x1xf32> to vector<8x32xf32>
    %82 = arith.subf %69, %81 : vector<8x32xf32>
    %cst_43 = arith.constant 9.99999974E-6 : f32
    %83 = vector.broadcast %cst_43 : f32 to vector<8x1xf32>
    %84 = arith.addf %80, %83 : vector<8x1xf32>
    %85 = math.rsqrt %84 : vector<8x1xf32>
    %86 = vector.broadcast %85 : vector<8x1xf32> to vector<8x32xf32>
    %87 = arith.mulf %82, %86 : vector<8x32xf32>
    %88 = vector.broadcast %16 : vector<1x32xf32> to vector<8x32xf32>
    %89 = arith.mulf %87, %88 : vector<8x32xf32>
    %90 = vector.broadcast %17 : vector<1x32xf32> to vector<8x32xf32>
    %91 = arith.addf %89, %90 : vector<8x32xf32>
    %cst_44 = arith.constant dense<0.000000e+00> : vector<8x96xf32>
    %92 = tpu.matmul %91, %8, %cst_44 {dimension_numbers = #tpu.dot_dimension_numbers<[1], [0], [0], [1], [0, 0, 1, 1], [], []>} : vector<8x32xf32>, vector<32x96xf32>, vector<8x96xf32> -> vector<8x96xf32>
    %93 = vector.broadcast %9 : vector<1x96xf32> to vector<8x96xf32>
    %94 = arith.addf %92, %93 : vector<8x96xf32>
    %cst_45 = arith.constant dense<0.000000e+00> : vector<16x96xf32>
    %95 = tpu.matmul %3, %8, %cst_45 {dimension_numbers = #tpu.dot_dimension_numbers<[1], [0], [0], [1], [0, 0, 1, 1], [], []>} : vector<16x32xf32>, vector<32x96xf32>, vector<16x96xf32> -> vector<16x96xf32>
    %96 = vector.broadcast %9 : vector<1x96xf32> to vector<16x96xf32>
    %97 = arith.addf %95, %96 : vector<16x96xf32>
    %98 = vector.extract_strided_slice %94 {offsets = [0, 0], sizes = [8, 32], strides = [1, 1]} : vector<8x96xf32> to vector<8x32xf32>
    %cst_46 = arith.constant 2.500000e-01 : f32
    %99 = vector.broadcast %cst_46 : f32 to vector<8x32xf32>
    %100 = arith.mulf %98, %99 : vector<8x32xf32>
    %101 = vector.extract_strided_slice %97 {offsets = [0, 32], sizes = [16, 32], strides = [1, 1]} : vector<16x96xf32> to vector<16x32xf32>
    %102 = vector.extract_strided_slice %97 {offsets = [0, 64], sizes = [16, 32], strides = [1, 1]} : vector<16x96xf32> to vector<16x32xf32>
    %103 = vector.extract_strided_slice %100 {offsets = [0, 0], sizes = [8, 16], strides = [1, 1]} : vector<8x32xf32> to vector<8x16xf32>
    %104 = vector.extract_strided_slice %101 {offsets = [0, 0], sizes = [16, 16], strides = [1, 1]} : vector<16x32xf32> to vector<16x16xf32>
    %105 = vector.extract_strided_slice %102 {offsets = [0, 0], sizes = [16, 16], strides = [1, 1]} : vector<16x32xf32> to vector<16x16xf32>
    %cst_47 = arith.constant dense<0.000000e+00> : vector<8x16xf32>
    %106 = tpu.matmul %103, %104, %cst_47 {dimension_numbers = #tpu.dot_dimension_numbers<[1], [1], [0], [0], [0, 0, 1, 0], [], []>} : vector<8x16xf32>, vector<16x16xf32>, vector<8x16xf32> -> vector<8x16xf32>
    %cst_48 = arith.constant 5.000000e-01 : f32
    %107 = vector.broadcast %cst_48 : f32 to vector<8x16xf32>
    %108 = arith.cmpf ogt, %7, %107 : vector<8x16xf32>
    %cst_49 = arith.constant -1.000000e+09 : f32
    %109 = vector.broadcast %cst_49 : f32 to vector<8x16xf32>
    %110 = arith.select %108, %109, %106 : vector<8x16xi1>, vector<8x16xf32>
    %cst_50 = arith.constant dense<0xFF800000> : vector<8xf32>
    %111 = vector.multi_reduction <maximumf>, %110, %cst_50 [1] : vector<8x16xf32> to vector<8xf32>
    %112 = vector.shape_cast %111 : vector<8xf32> to vector<8x1xf32>
    %113 = vector.broadcast %112 : vector<8x1xf32> to vector<8x16xf32>
    %114 = arith.subf %110, %113 : vector<8x16xf32>
    %115 = math.exp %114 : vector<8x16xf32>
    %cst_51 = arith.constant dense<0.000000e+00> : vector<8xf32>
    %116 = vector.multi_reduction <add>, %115, %cst_51 [1] : vector<8x16xf32> to vector<8xf32>
    %117 = vector.shape_cast %116 : vector<8xf32> to vector<8x1xf32>
    %118 = vector.broadcast %117 : vector<8x1xf32> to vector<8x16xf32>
    %119 = arith.divf %115, %118 : vector<8x16xf32>
    %cst_52 = arith.constant dense<0.000000e+00> : vector<8x16xf32>
    %120 = tpu.matmul %119, %105, %cst_52 {dimension_numbers = #tpu.dot_dimension_numbers<[1], [0], [0], [1], [0, 0, 1, 1], [], []>} : vector<8x16xf32>, vector<16x16xf32>, vector<8x16xf32> -> vector<8x16xf32>
    %121 = vector.extract_strided_slice %100 {offsets = [0, 16], sizes = [8, 16], strides = [1, 1]} : vector<8x32xf32> to vector<8x16xf32>
    %122 = vector.extract_strided_slice %101 {offsets = [0, 16], sizes = [16, 16], strides = [1, 1]} : vector<16x32xf32> to vector<16x16xf32>
    %123 = vector.extract_strided_slice %102 {offsets = [0, 16], sizes = [16, 16], strides = [1, 1]} : vector<16x32xf32> to vector<16x16xf32>
    %cst_53 = arith.constant dense<0.000000e+00> : vector<8x16xf32>
    %124 = tpu.matmul %121, %122, %cst_53 {dimension_numbers = #tpu.dot_dimension_numbers<[1], [1], [0], [0], [0, 0, 1, 0], [], []>} : vector<8x16xf32>, vector<16x16xf32>, vector<8x16xf32> -> vector<8x16xf32>
    %cst_54 = arith.constant 5.000000e-01 : f32
    %125 = vector.broadcast %cst_54 : f32 to vector<8x16xf32>
    %126 = arith.cmpf ogt, %7, %125 : vector<8x16xf32>
    %cst_55 = arith.constant -1.000000e+09 : f32
    %127 = vector.broadcast %cst_55 : f32 to vector<8x16xf32>
    %128 = arith.select %126, %127, %124 : vector<8x16xi1>, vector<8x16xf32>
    %cst_56 = arith.constant dense<0xFF800000> : vector<8xf32>
    %129 = vector.multi_reduction <maximumf>, %128, %cst_56 [1] : vector<8x16xf32> to vector<8xf32>
    %130 = vector.shape_cast %129 : vector<8xf32> to vector<8x1xf32>
    %131 = vector.broadcast %130 : vector<8x1xf32> to vector<8x16xf32>
    %132 = arith.subf %128, %131 : vector<8x16xf32>
    %133 = math.exp %132 : vector<8x16xf32>
    %cst_57 = arith.constant dense<0.000000e+00> : vector<8xf32>
    %134 = vector.multi_reduction <add>, %133, %cst_57 [1] : vector<8x16xf32> to vector<8xf32>
    %135 = vector.shape_cast %134 : vector<8xf32> to vector<8x1xf32>
    %136 = vector.broadcast %135 : vector<8x1xf32> to vector<8x16xf32>
    %137 = arith.divf %133, %136 : vector<8x16xf32>
    %cst_58 = arith.constant dense<0.000000e+00> : vector<8x16xf32>
    %138 = tpu.matmul %137, %123, %cst_58 {dimension_numbers = #tpu.dot_dimension_numbers<[1], [0], [0], [1], [0, 0, 1, 1], [], []>} : vector<8x16xf32>, vector<16x16xf32>, vector<8x16xf32> -> vector<8x16xf32>
    %139 = tpu.concatenate %120, %138 in 1 : vector<8x16xf32>, vector<8x16xf32> -> vector<8x32xf32>
    %cst_59 = arith.constant dense<0.000000e+00> : vector<8x32xf32>
    %140 = tpu.matmul %139, %10, %cst_59 {dimension_numbers = #tpu.dot_dimension_numbers<[1], [0], [0], [1], [0, 0, 1, 1], [], []>} : vector<8x32xf32>, vector<32x32xf32>, vector<8x32xf32> -> vector<8x32xf32>
    %141 = vector.broadcast %15 : vector<1x32xf32> to vector<8x32xf32>
    %142 = arith.addf %140, %141 : vector<8x32xf32>
    %143 = arith.addf %91, %142 : vector<8x32xf32>
    %cst_60 = arith.constant dense<0.000000e+00> : vector<8xf32>
    %144 = vector.multi_reduction <add>, %143, %cst_60 [1] : vector<8x32xf32> to vector<8xf32>
    %145 = vector.shape_cast %144 : vector<8xf32> to vector<8x1xf32>
    %cst_61 = arith.constant 3.200000e+01 : f32
    %146 = vector.broadcast %cst_61 : f32 to vector<8x1xf32>
    %147 = arith.divf %145, %146 : vector<8x1xf32>
    %148 = vector.broadcast %147 : vector<8x1xf32> to vector<8x32xf32>
    %149 = arith.subf %143, %148 : vector<8x32xf32>
    %150 = arith.mulf %149, %149 : vector<8x32xf32>
    %cst_62 = arith.constant dense<0.000000e+00> : vector<8xf32>
    %151 = vector.multi_reduction <add>, %150, %cst_62 [1] : vector<8x32xf32> to vector<8xf32>
    %152 = vector.shape_cast %151 : vector<8xf32> to vector<8x1xf32>
    %cst_63 = arith.constant 3.200000e+01 : f32
    %153 = vector.broadcast %cst_63 : f32 to vector<8x1xf32>
    %154 = arith.divf %152, %153 : vector<8x1xf32>
    %155 = vector.broadcast %147 : vector<8x1xf32> to vector<8x32xf32>
    %156 = arith.subf %143, %155 : vector<8x32xf32>
    %cst_64 = arith.constant 9.99999974E-6 : f32
    %157 = vector.broadcast %cst_64 : f32 to vector<8x1xf32>
    %158 = arith.addf %154, %157 : vector<8x1xf32>
    %159 = math.rsqrt %158 : vector<8x1xf32>
    %160 = vector.broadcast %159 : vector<8x1xf32> to vector<8x32xf32>
    %161 = arith.mulf %156, %160 : vector<8x32xf32>
    %162 = vector.broadcast %16 : vector<1x32xf32> to vector<8x32xf32>
    %163 = arith.mulf %161, %162 : vector<8x32xf32>
    %164 = vector.broadcast %17 : vector<1x32xf32> to vector<8x32xf32>
    %165 = arith.addf %163, %164 : vector<8x32xf32>
    %cst_65 = arith.constant dense<0.000000e+00> : vector<8x64xf32>
    %166 = tpu.matmul %165, %11, %cst_65 {dimension_numbers = #tpu.dot_dimension_numbers<[1], [0], [0], [1], [0, 0, 1, 1], [], []>} : vector<8x32xf32>, vector<32x64xf32>, vector<8x64xf32> -> vector<8x64xf32>
    %167 = vector.broadcast %12 : vector<1x64xf32> to vector<8x64xf32>
    %168 = arith.addf %166, %167 : vector<8x64xf32>
    %cst_66 = arith.constant 0.000000e+00 : f32
    %169 = vector.broadcast %cst_66 : f32 to vector<8x64xf32>
    %170 = arith.maximumf %168, %169 : vector<8x64xf32>
    %cst_67 = arith.constant dense<0.000000e+00> : vector<8x32xf32>
    %171 = tpu.matmul %170, %13, %cst_67 {dimension_numbers = #tpu.dot_dimension_numbers<[1], [0], [0], [1], [0, 0, 1, 1], [], []>} : vector<8x64xf32>, vector<64x32xf32>, vector<8x32xf32> -> vector<8x32xf32>
    %172 = vector.broadcast %18 : vector<1x32xf32> to vector<8x32xf32>
    %173 = arith.addf %171, %172 : vector<8x32xf32>
    %174 = arith.addf %165, %173 : vector<8x32xf32>
    %cst_68 = arith.constant dense<0.000000e+00> : vector<8xf32>
    %175 = vector.multi_reduction <add>, %174, %cst_68 [1] : vector<8x32xf32> to vector<8xf32>
    %176 = vector.shape_cast %175 : vector<8xf32> to vector<8x1xf32>
    %cst_69 = arith.constant 3.200000e+01 : f32
    %177 = vector.broadcast %cst_69 : f32 to vector<8x1xf32>
    %178 = arith.divf %176, %177 : vector<8x1xf32>
    %179 = vector.broadcast %178 : vector<8x1xf32> to vector<8x32xf32>
    %180 = arith.subf %174, %179 : vector<8x32xf32>
    %181 = arith.mulf %180, %180 : vector<8x32xf32>
    %cst_70 = arith.constant dense<0.000000e+00> : vector<8xf32>
    %182 = vector.multi_reduction <add>, %181, %cst_70 [1] : vector<8x32xf32> to vector<8xf32>
    %183 = vector.shape_cast %182 : vector<8xf32> to vector<8x1xf32>
    %cst_71 = arith.constant 3.200000e+01 : f32
    %184 = vector.broadcast %cst_71 : f32 to vector<8x1xf32>
    %185 = arith.divf %183, %184 : vector<8x1xf32>
    %186 = vector.broadcast %178 : vector<8x1xf32> to vector<8x32xf32>
    %187 = arith.subf %174, %186 : vector<8x32xf32>
    %cst_72 = arith.constant 9.99999974E-6 : f32
    %188 = vector.broadcast %cst_72 : f32 to vector<8x1xf32>
    %189 = arith.addf %185, %188 : vector<8x1xf32>
    %190 = math.rsqrt %189 : vector<8x1xf32>
    %191 = vector.broadcast %190 : vector<8x1xf32> to vector<8x32xf32>
    %192 = arith.mulf %187, %191 : vector<8x32xf32>
    %193 = vector.broadcast %19 : vector<1x32xf32> to vector<8x32xf32>
    %194 = arith.mulf %192, %193 : vector<8x32xf32>
    %195 = vector.broadcast %20 : vector<1x32xf32> to vector<8x32xf32>
    %196 = arith.addf %194, %195 : vector<8x32xf32>
    %c0_73 = arith.constant 0 : index
    %c0_74 = arith.constant 0 : index
    %c0_75 = arith.constant 0 : index
    %197 = vector.load %arg12[%c0_73, %c0_74, %c0_75] : memref<1x8x32xf32, #tpu.memory_space<vmem>>, vector<1x8x32xf32>
    %198 = vector.shape_cast %197 : vector<1x8x32xf32> to vector<8x32xf32>
    %199 = vector.shape_cast %196 : vector<8x32xf32> to vector<1x8x32xf32>
    tpu.vector_store %arg12[%c0_73, %c0_74, %c0_75], %199 {strides = array<i32>} : memref<1x8x32xf32, #tpu.memory_space<vmem>>, vector<1x8x32xf32>,
    return
  }
  func.func @transform_0(%arg0: i32) -> (i32, i32, i32) {
    %c0_i32 = arith.constant 0 : i32
    %c0_i32_0 = arith.constant 0 : i32
    %c0_i32_1 = arith.constant 0 : i32
    return %arg0, %c0_i32, %c0_i32_0 : i32, i32, i32
  }
  func.func @transform_1(%arg0: i32) -> (i32, i32, i32) {
    %c0_i32 = arith.constant 0 : i32
    %c0_i32_0 = arith.constant 0 : i32
    %c0_i32_1 = arith.constant 0 : i32
    return %arg0, %c0_i32, %c0_i32_0 : i32, i32, i32
  }
  func.func @transform_2(%arg0: i32) -> (i32, i32, i32) {
    %c0_i32 = arith.constant 0 : i32
    %c0_i32_0 = arith.constant 0 : i32
    %c0_i32_1 = arith.constant 0 : i32
    return %arg0, %c0_i32, %c0_i32_0 : i32, i32, i32
  }
  func.func @transform_3(%arg0: i32) -> (i32, i32, i32) {
    %c0_i32 = arith.constant 0 : i32
    %c0_i32_0 = arith.constant 0 : i32
    %c0_i32_1 = arith.constant 0 : i32
    return %arg0, %c0_i32, %c0_i32_0 : i32, i32, i32
  }
  func.func @transform_4(%arg0: i32) -> (i32, i32) {
    %c0_i32 = arith.constant 0 : i32
    %c0_i32_0 = arith.constant 0 : i32
    %c0_i32_1 = arith.constant 0 : i32
    return %c0_i32, %c0_i32_0 : i32, i32
  }
  func.func @transform_5(%arg0: i32) -> (i32, i32) {
    %c0_i32 = arith.constant 0 : i32
    %c0_i32_0 = arith.constant 0 : i32
    %c0_i32_1 = arith.constant 0 : i32
    return %c0_i32, %c0_i32_0 : i32, i32
  }
  func.func @transform_6(%arg0: i32) -> (i32, i32) {
    %c0_i32 = arith.constant 0 : i32
    %c0_i32_0 = arith.constant 0 : i32
    %c0_i32_1 = arith.constant 0 : i32
    return %c0_i32, %c0_i32_0 : i32, i32
  }
  func.func @transform_7(%arg0: i32) -> (i32, i32) {
    %c0_i32 = arith.constant 0 : i32
    %c0_i32_0 = arith.constant 0 : i32
    %c0_i32_1 = arith.constant 0 : i32
    return %c0_i32, %c0_i32_0 : i32, i32
  }
  func.func @transform_8(%arg0: i32) -> (i32, i32) {
    %c0_i32 = arith.constant 0 : i32
    %c0_i32_0 = arith.constant 0 : i32
    %c0_i32_1 = arith.constant 0 : i32
    return %c0_i32, %c0_i32_0 : i32, i32
  }
  func.func @transform_9(%arg0: i32) -> (i32, i32) {
    %c0_i32 = arith.constant 0 : i32
    %c0_i32_0 = arith.constant 0 : i32
    %c0_i32_1 = arith.constant 0 : i32
    return %c0_i32, %c0_i32_0 : i32, i32
  }
  func.func @transform_10(%arg0: i32) -> (i32, i32) {
    %c0_i32 = arith.constant 0 : i32
    %c0_i32_0 = arith.constant 0 : i32
    %c0_i32_1 = arith.constant 0 : i32
    return %c0_i32, %c0_i32_0 : i32, i32
  }
  func.func @transform_11(%arg0: i32) -> (i32, i32, i32) {
    %c0_i32 = arith.constant 0 : i32
    %c0_i32_0 = arith.constant 0 : i32
    %c0_i32_1 = arith.constant 0 : i32
    return %arg0, %c0_i32, %c0_i32_0 : i32, i32, i32
  }
}

</mosaic_0001>

<llo_original>
// kernel: tpu_custom_call.1
$region0: #{tpu_custom_call.1}
  #allocation0 [shape = 'u32[]', space=smem, size = 0x4, offset = 0x4, fixed_abs, tag = 'smem constant byte address 0x4 - core index']
  #allocation1 [shape = 'u32[72,128]{1,0:T(1,128)}', space=vmem, size = 0x9000, scoped, tag = 'internal scratch']
  %s0 = inlined_call_operand.hbm [shape: f32[2,8,32], index: 0, kind: input, shape index: {}]
  %s1 = inlined_call_operand.vmem [shape: f32[2,16,32], index: 1, kind: input, shape index: {}]
  %s2 = inlined_call_operand.hbm [shape: f32[2,8,8], index: 2, kind: input, shape index: {}]
  %s3 = inlined_call_operand.hbm [shape: f32[2,8,16], index: 3, kind: input, shape index: {}]
  %s4 = inlined_call_operand.vmem [shape: f32[32,96], index: 4, kind: input, shape index: {}]
  %s5 = inlined_call_operand.vmem [shape: f32[1,96], index: 5, kind: input, shape index: {}]
  %s6 = inlined_call_operand.vmem [shape: f32[32,32], index: 6, kind: input, shape index: {}]
  %s7 = inlined_call_operand.hbm [shape: f32[32,64], index: 7, kind: input, shape index: {}]
  %s8 = inlined_call_operand.hbm [shape: f32[1,64], index: 8, kind: input, shape index: {}]
  %s9 = inlined_call_operand.vmem [shape: f32[64,32], index: 9, kind: input, shape index: {}]
  %s10 = inlined_call_operand.vmem [shape: f32[6,32], index: 10, kind: input, shape index: {}]
  %s11 = inlined_call_operand.hbm [shape: f32[2,8,32], index: 11, kind: output, shape index: {}]
  %s12 = sld [smem:[#allocation0]]
  $region97: #{tpu_custom_call.1} parent=0
    _
  %s14 = ssub.s32 1, %s12
  %s15 = scalar_select 0, %s14, %s12
  $region1: #{tpu_custom_call.1} parent=0
    #allocation2 [shape = 'u8[8192]{0}', space=vmem, size = 0x2000, scoped, tag = 'input window, operand 0']
    #allocation3 [shape = 's32[2]{0}', space=sflag, size = 0x8, scoped, tag = 'scoped memory for tpu_custom_call.1']
    #allocation4 [shape = 's32[2]{0}', space=sflag, size = 0x8, scoped, tag = 'scoped memory for tpu_custom_call.1']
    #allocation5 [shape = 'u8[8192]{0}', space=vmem, size = 0x2000, scoped, tag = 'input window, operand 2']
    #allocation6 [shape = 's32[2]{0}', space=sflag, size = 0x8, scoped, tag = 'scoped memory for tpu_custom_call.1']
    #allocation7 [shape = 'u8[8192]{0}', space=vmem, size = 0x2000, scoped, tag = 'input window, operand 3']
    #allocation8 [shape = 'u8[16384]{0}', space=vmem, size = 0x4000, scoped, tag = 'input window, operand 7, single buffered']
    #allocation9 [shape = 's32[1]{0}', space=sflag, size = 0x4, scoped, tag = 'scoped memory for tpu_custom_call.1']
    #allocation10 [shape = 'u8[512]{0}', space=vmem, size = 0x400, scoped, tag = 'input window, operand 8, single buffered']
    #allocation11 [shape = 'u8[8192]{0}', space=vmem, size = 0x2000, scoped, tag = 'output window, operand 0']
    %16 = vsyncpa [#allocation3], 0
    %s17 = scalar_lea.sflag [#allocation3], 1
    %18 = vsyncpa %s17, 0
    %19 = vsyncpa [#allocation6], 0
    %s20 = scalar_lea.sflag [#allocation6], 1
    %21 = vsyncpa %s20, 0
    %22 = vsyncpa [#allocation9], 0
    %23 = vsyncpa [#allocation4], 0
    %s24 = scalar_lea.sflag [#allocation4], 1
    %25 = vsyncpa %s24, 0
    loop: start=0, step=1, limit=4
    $region2: #{tpu_custom_call.1} parent=1 // loop_pre_header
      _
    $region3: #{tpu_custom_call.1} parent=1 // loop_header
      %s27 = sphi 0, %s31
      %p28 = scmp.ge.s32.totalorder %s27, 4
      %s37 = sphi 0, %s39
      %s40 = sphi 0, %s37
      %s41 = sphi 0, %s40
      %s57 = sphi 0, %s41
      %s63 = sphi 0, %s65
      %s66 = sphi 0, %s63
      %s67 = sphi 0, %s66
      %s83 = sphi 0, %s67
      %s89 = sphi 0, %s91
      %s92 = sphi 0, %s89
      %s93 = sphi 0, %s92
      %s109 = sphi 0, %s93
      %s115 = sphi 0, %s117
      %s118 = sphi 0, %s115
      %s119 = sphi 0, %s118
      %s135 = sphi 0, %s119
      %s139 = sphi 0, %s139
      %s141 = sphi 0, %s139
      %s142 = sphi 0, %s141
      %s156 = sphi 0, %s142
      %s160 = sphi 0, %s160
      %s162 = sphi 0, %s160
      %s163 = sphi 0, %s162
      %s177 = sphi 0, %s163
      %s181 = sphi 0, %s181
      %s183 = sphi 0, %s181
      %s184 = sphi 0, %s183
      %s198 = sphi 0, %s184
      %s202 = sphi 0, %s202
      %s204 = sphi 0, %s202
      %s205 = sphi 0, %s204
      %s219 = sphi 0, %s205
      %s223 = sphi 0, %s223
      %s225 = sphi 0, %s223
      %s226 = sphi 0, %s225
      %s240 = sphi 0, %s226
      %s244 = sphi 0, %s244
      %s246 = sphi 0, %s244
      %s247 = sphi 0, %s246
      %s261 = sphi 0, %s247
      %s265 = sphi 0, %s265
      %s267 = sphi 0, %s265
      %s268 = sphi 0, %s267
      %s282 = sphi 0, %s268
      %s288 = sphi 0, %s290
      %s291 = sphi 0, %s288
      %s292 = sphi 0, %s291
      %s308 = sphi 0, %s292
    $region4: #{tpu_custom_call.1} parent=1 // loop_header_branch
      %30 = sbr.rel (%p28) target = $region8
    $region5: #{tpu_custom_call.1} parent=1 // loop_body
      %s32 = ssub.s32 %s27, 1
      %s33 = ssub.s32 %s27, 2
      %s34 = sadd.s32 %s27, 1
      %s35 = ssub.s32 %s27, %s34
      %p36 = scmp.eq.s32.totalorder %s35, 0
      %s38 = sadd.s32 %s37, 1
      %s39 = scalar_select %p36, %s37, %s38
      %p42 = pneg %p36
      %p43 = scmp.eq.s32.totalorder %s27, 1
      %p44 = por %p42, %p43
      %p45 = scmp.ne.s32.totalorder %s37, %s40
      %p46 = scmp.eq.s32.totalorder %s27, 0
      %p47 = por %p45, %p46
      %p48 = scmp.ne.s32.totalorder %s37, %s40
      %p49 = scmp.eq.s32.totalorder %s32, 1
      %p50 = por %p48, %p49
      %p51 = scmp.ne.s32.totalorder %s40, %s41
      %p52 = scmp.eq.s32.totalorder %s32, 0
      %p53 = por %p51, %p52
      %p54 = scmp.ne.s32.totalorder %s40, %s41
      %p55 = scmp.eq.s32.totalorder %s33, 1
      %p56 = por %p54, %p55
      %p58 = scmp.ne.s32.totalorder %s41, %s57
      %p59 = scmp.eq.s32.totalorder %s33, 0
      %p60 = por %p58, %p59
      %s61 = ssub.s32 %s27, %s34
      %p62 = scmp.eq.s32.totalorder %s61, 0
      %s64 = sadd.s32 %s63, 1
      %s65 = scalar_select %p62, %s63, %s64
      %p68 = pneg %p62
      %p69 = scmp.eq.s32.totalorder %s27, 1
      %p70 = por %p68, %p69
      %p71 = scmp.ne.s32.totalorder %s63, %s66
      %p72 = scmp.eq.s32.totalorder %s27, 0
      %p73 = por %p71, %p72
      %p74 = scmp.ne.s32.totalorder %s63, %s66
      %p75 = scmp.eq.s32.totalorder %s32, 1
      %p76 = por %p74, %p75
      %p77 = scmp.ne.s32.totalorder %s66, %s67
      %p78 = scmp.eq.s32.totalorder %s32, 0
      %p79 = por %p77, %p78
      %p80 = scmp.ne.s32.totalorder %s66, %s67
      %p81 = scmp.eq.s32.totalorder %s33, 1
      %p82 = por %p80, %p81
      %p84 = scmp.ne.s32.totalorder %s67, %s83
      %p85 = scmp.eq.s32.totalorder %s33, 0
      %p86 = por %p84, %p85
      %s87 = ssub.s32 %s27, %s34
      %p88 = scmp.eq.s32.totalorder %s87, 0
      %s90 = sadd.s32 %s89, 1
      %s91 = scalar_select %p88, %s89, %s90
      %p94 = pneg %p88
      %p95 = scmp.eq.s32.totalorder %s27, 1
      %p96 = por %p94, %p95
      %p97 = scmp.ne.s32.totalorder %s89, %s92
      %p98 = scmp.eq.s32.totalorder %s27, 0
      %p99 = por %p97, %p98
      %p100 = scmp.ne.s32.totalorder %s89, %s92
      %p101 = scmp.eq.s32.totalorder %s32, 1
      %p102 = por %p100, %p101
      %p103 = scmp.ne.s32.totalorder %s92, %s93
      %p104 = scmp.eq.s32.totalorder %s32, 0
      %p105 = por %p103, %p104
      %p106 = scmp.ne.s32.totalorder %s92, %s93
      %p107 = scmp.eq.s32.totalorder %s33, 1
      %p108 = por %p106, %p107
      %p110 = scmp.ne.s32.totalorder %s93, %s109
      %p111 = scmp.eq.s32.totalorder %s33, 0
      %p112 = por %p110, %p111
      %s113 = ssub.s32 %s27, %s34
      %p114 = scmp.eq.s32.totalorder %s113, 0
      %s116 = sadd.s32 %s115, 1
      %s117 = scalar_select %p114, %s115, %s116
      %p120 = pneg %p114
      %p121 = scmp.eq.s32.totalorder %s27, 1
      %p122 = por %p120, %p121
      %p123 = scmp.ne.s32.totalorder %s115, %s118
      %p124 = scmp.eq.s32.totalorder %s27, 0
      %p125 = por %p123, %p124
      %p126 = scmp.ne.s32.totalorder %s115, %s118
      %p127 = scmp.eq.s32.totalorder %s32, 1
      %p128 = por %p126, %p127
      %p129 = scmp.ne.s32.totalorder %s118, %s119
      %p130 = scmp.eq.s32.totalorder %s32, 0
      %p131 = por %p129, %p130
      %p132 = scmp.ne.s32.totalorder %s118, %s119
      %p133 = scmp.eq.s32.totalorder %s33, 1
      %p134 = por %p132, %p133
      %p136 = scmp.ne.s32.totalorder %s119, %s135
      %p137 = scmp.eq.s32.totalorder %s33, 0
      %p138 = por %p136, %p137
      %s140 = sadd.s32 %s139, 1
      %p143 = scmp.eq.s32.totalorder %s27, 1
      %p144 = scmp.ne.s32.totalorder %s139, %s141
      %p145 = scmp.eq.s32.totalorder %s27, 0
      %p146 = por %p144, %p145
      %p147 = scmp.ne.s32.totalorder %s139, %s141
      %p148 = scmp.eq.s32.totalorder %s32, 1
      %p149 = por %p147, %p148
      %p150 = scmp.ne.s32.totalorder %s141, %s142
      %p151 = scmp.eq.s32.totalorder %s32, 0
      %p152 = por %p150, %p151
      %p153 = scmp.ne.s32.totalorder %s141, %s142
      %p154 = scmp.eq.s32.totalorder %s33, 1
      %p155 = por %p153, %p154
      %p157 = scmp.ne.s32.totalorder %s142, %s156
      %p158 = scmp.eq.s32.totalorder %s33, 0
      %p159 = por %p157, %p158
      %s161 = sadd.s32 %s160, 1
      %p164 = scmp.eq.s32.totalorder %s27, 1
      %p165 = scmp.ne.s32.totalorder %s160, %s162
      %p166 = scmp.eq.s32.totalorder %s27, 0
      %p167 = por %p165, %p166
      %p168 = scmp.ne.s32.totalorder %s160, %s162
      %p169 = scmp.eq.s32.totalorder %s32, 1
      %p170 = por %p168, %p169
      %p171 = scmp.ne.s32.totalorder %s162, %s163
      %p172 = scmp.eq.s32.totalorder %s32, 0
      %p173 = por %p171, %p172
      %p174 = scmp.ne.s32.totalorder %s162, %s163
      %p175 = scmp.eq.s32.totalorder %s33, 1
      %p176 = por %p174, %p175
      %p178 = scmp.ne.s32.totalorder %s163, %s177
      %p179 = scmp.eq.s32.totalorder %s33, 0
      %p180 = por %p178, %p179
      %s182 = sadd.s32 %s181, 1
      %p185 = scmp.eq.s32.totalorder %s27, 1
      %p186 = scmp.ne.s32.totalorder %s181, %s183
      %p187 = scmp.eq.s32.totalorder %s27, 0
      %p188 = por %p186, %p187
      %p189 = scmp.ne.s32.totalorder %s181, %s183
      %p190 = scmp.eq.s32.totalorder %s32, 1
      %p191 = por %p189, %p190
      %p192 = scmp.ne.s32.totalorder %s183, %s184
      %p193 = scmp.eq.s32.totalorder %s32, 0
      %p194 = por %p192, %p193
      %p195 = scmp.ne.s32.totalorder %s183, %s184
      %p196 = scmp.eq.s32.totalorder %s33, 1
      %p197 = por %p195, %p196
      %p199 = scmp.ne.s32.totalorder %s184, %s198
      %p200 = scmp.eq.s32.totalorder %s33, 0
      %p201 = por %p199, %p200
      %s203 = sadd.s32 %s202, 1
      %p206 = scmp.eq.s32.totalorder %s27, 1
      %p207 = scmp.ne.s32.totalorder %s202, %s204
      %p208 = scmp.eq.s32.totalorder %s27, 0
      %p209 = por %p207, %p208
      %p210 = scmp.ne.s32.totalorder %s202, %s204
      %p211 = scmp.eq.s32.totalorder %s32, 1
      %p212 = por %p210, %p211
      %p213 = scmp.ne.s32.totalorder %s204, %s205
      %p214 = scmp.eq.s32.totalorder %s32, 0
      %p215 = por %p213, %p214
      %p216 = scmp.ne.s32.totalorder %s204, %s205
      %p217 = scmp.eq.s32.totalorder %s33, 1
      %p218 = por %p216, %p217
      %p220 = scmp.ne.s32.totalorder %s205, %s219
      %p221 = scmp.eq.s32.totalorder %s33, 0
      %p222 = por %p220, %p221
      %s224 = sadd.s32 %s223, 1
      %p227 = scmp.eq.s32.totalorder %s27, 1
      %p228 = scmp.ne.s32.totalorder %s223, %s225
      %p229 = scmp.eq.s32.totalorder %s27, 0
      %p230 = por %p228, %p229
      %p231 = scmp.ne.s32.totalorder %s223, %s225
      %p232 = scmp.eq.s32.totalorder %s32, 1
      %p233 = por %p231, %p232
      %p234 = scmp.ne.s32.totalorder %s225, %s226
      %p235 = scmp.eq.s32.totalorder %s32, 0
      %p236 = por %p234, %p235
      %p237 = scmp.ne.s32.totalorder %s225, %s226
      %p238 = scmp.eq.s32.totalorder %s33, 1
      %p239 = por %p237, %p238
      %p241 = scmp.ne.s32.totalorder %s226, %s240
      %p242 = scmp.eq.s32.totalorder %s33, 0
      %p243 = por %p241, %p242
      %s245 = sadd.s32 %s244, 1
      %p248 = scmp.eq.s32.totalorder %s27, 1
      %p249 = scmp.ne.s32.totalorder %s244, %s246
      %p250 = scmp.eq.s32.totalorder %s27, 0
      %p251 = por %p249, %p250
      %p252 = scmp.ne.s32.totalorder %s244, %s246
      %p253 = scmp.eq.s32.totalorder %s32, 1
      %p254 = por %p252, %p253
      %p255 = scmp.ne.s32.totalorder %s246, %s247
      %p256 = scmp.eq.s32.totalorder %s32, 0
      %p257 = por %p255, %p256
      %p258 = scmp.ne.s32.totalorder %s246, %s247
      %p259 = scmp.eq.s32.totalorder %s33, 1
      %p260 = por %p258, %p259
      %p262 = scmp.ne.s32.totalorder %s247, %s261
      %p263 = scmp.eq.s32.totalorder %s33, 0
      %p264 = por %p262, %p263
      %s266 = sadd.s32 %s265, 1
      %p269 = scmp.eq.s32.totalorder %s27, 1
      %p270 = scmp.ne.s32.totalorder %s265, %s267
      %p271 = scmp.eq.s32.totalorder %s27, 0
      %p272 = por %p270, %p271
      %p273 = scmp.ne.s32.totalorder %s265, %s267
      %p274 = scmp.eq.s32.totalorder %s32, 1
      %p275 = por %p273, %p274
      %p276 = scmp.ne.s32.totalorder %s267, %s268
      %p277 = scmp.eq.s32.totalorder %s32, 0
      %p278 = por %p276, %p277
      %p279 = scmp.ne.s32.totalorder %s267, %s268
      %p280 = scmp.eq.s32.totalorder %s33, 1
      %p281 = por %p279, %p280
      %p283 = scmp.ne.s32.totalorder %s268, %s282
      %p284 = scmp.eq.s32.totalorder %s33, 0
      %p285 = por %p283, %p284
      %s286 = ssub.s32 %s27, %s34
      %p287 = scmp.eq.s32.totalorder %s286, 0
      %s289 = sadd.s32 %s288, 1
      %s290 = scalar_select %p287, %s288, %s289
      %p293 = pneg %p287
      %p294 = scmp.eq.s32.totalorder %s27, 1
      %p295 = por %p293, %p294
      %p296 = scmp.ne.s32.totalorder %s288, %s291
      %p297 = scmp.eq.s32.totalorder %s27, 0
      %p298 = por %p296, %p297
      %p299 = scmp.ne.s32.totalorder %s288, %s291
      %p300 = scmp.eq.s32.totalorder %s32, 1
      %p301 = por %p299, %p300
      %p302 = scmp.ne.s32.totalorder %s291, %s292
      %p303 = scmp.eq.s32.totalorder %s32, 0
      %p304 = por %p302, %p303
      %p305 = scmp.ne.s32.totalorder %s291, %s292
      %p306 = scmp.eq.s32.totalorder %s33, 1
      %p307 = por %p305, %p306
      %p309 = scmp.ne.s32.totalorder %s292, %s308
      %p310 = scmp.eq.s32.totalorder %s33, 0
      %p311 = por %p309, %p310
      %p312 = scmp.le.s32.totalorder 1, %s27
      %p313 = scmp.lt.s32.totalorder %s27, 3
      %p314 = pnand %p312, %p313
      %p315 = pneg %p314
      // Predicated region
      $region9: #{tpu_custom_call.1} parent=5 // pred_check
        _
      $region10: #{tpu_custom_call.1} parent=5 // pred_check_branch
        %317 = sbr.rel (%p314) target = $region12
      $region11: #{tpu_custom_call.1} parent=5 // pred_region
        %s318 = ssub.s32 %s27, 1
        // Predicated region
        $region13: #{tpu_custom_call.1} parent=11 // pred_check
          %p319 = pneg %p152
        $region14: #{tpu_custom_call.1} parent=11 // pred_check_branch
          %321 = sbr.rel (%p319) target = $region16
        $region15: #{tpu_custom_call.1} parent=11 // pred_region
          _
        $region16: #{tpu_custom_call.1} parent=11 // pred_fallthru
          _
        // Predicated region
        $region17: #{tpu_custom_call.1} parent=11 // pred_check
          %p322 = pneg %p173
        $region18: #{tpu_custom_call.1} parent=11 // pred_check_branch
          %324 = sbr.rel (%p322) target = $region20
        $region19: #{tpu_custom_call.1} parent=11 // pred_region
          _
        $region20: #{tpu_custom_call.1} parent=11 // pred_fallthru
          _
        // Predicated region
        $region21: #{tpu_custom_call.1} parent=11 // pred_check
          %p325 = pneg %p194
        $region22: #{tpu_custom_call.1} parent=11 // pred_check_branch
          %327 = sbr.rel (%p325) target = $region24
        $region23: #{tpu_custom_call.1} parent=11 // pred_region
          _
        $region24: #{tpu_custom_call.1} parent=11 // pred_fallthru
          _
        // Predicated region
        $region25: #{tpu_custom_call.1} parent=11 // pred_check
          %p328 = pneg %p215
        $region26: #{tpu_custom_call.1} parent=11 // pred_check_branch
          %330 = sbr.rel (%p328) target = $region28
        $region27: #{tpu_custom_call.1} parent=11 // pred_region
          %332 = vsyncadd [#allocation9], 0
          %s333 = sshll.u32 %s7, 4
          %s334 = int_to_ptr.hbm [resolvable:$true] %s333
          %s335 = sshll.u32 [#allocation8], 4
          %s336 = int_to_ptr.vmem [resolvable:$true] %s335
          %341 = dma.hbm_to_vmem [thread:$0]  %s334, 512, %s336, [#allocation9], 128, 128, 8
        $region28: #{tpu_custom_call.1} parent=11 // pred_fallthru
          _
        // Predicated region
        $region29: #{tpu_custom_call.1} parent=11 // pred_check
          %p342 = pneg %p236
        $region30: #{tpu_custom_call.1} parent=11 // pred_check_branch
          %344 = sbr.rel (%p342) target = $region32
        $region31: #{tpu_custom_call.1} parent=11 // pred_region
          %346 = vsyncadd [#allocation9], 0
          %s348 = sshll.u32 %s8, 4
          %s349 = int_to_ptr.hbm [resolvable:$true] %s348
          %s350 = sshll.u32 [#allocation10], 4
          %s351 = int_to_ptr.vmem [resolvable:$true] %s350
          %353 = dma.hbm_to_vmem [thread:$0]  %s349, 16, %s351, [#allocation9]
        $region32: #{tpu_custom_call.1} parent=11 // pred_fallthru
          _
        // Predicated region
        $region33: #{tpu_custom_call.1} parent=11 // pred_check
          %p354 = pneg %p257
        $region34: #{tpu_custom_call.1} parent=11 // pred_check_branch
          %356 = sbr.rel (%p354) target = $region36
        $region35: #{tpu_custom_call.1} parent=11 // pred_region
          _
        $region36: #{tpu_custom_call.1} parent=11 // pred_fallthru
          _
        // Predicated region
        $region37: #{tpu_custom_call.1} parent=11 // pred_check
          %p357 = pneg %p278
        $region38: #{tpu_custom_call.1} parent=11 // pred_check_branch
          %359 = sbr.rel (%p357) target = $region40
        $region39: #{tpu_custom_call.1} parent=11 // pred_region
          _
        $region40: #{tpu_custom_call.1} parent=11 // pred_fallthru
          _
      $region12: #{tpu_custom_call.1} parent=5 // pred_fallthru
        _
      %p360 = scmp.lt.s32.totalorder %s27, 2
      // Predicated region
      $region41: #{tpu_custom_call.1} parent=5 // pred_check
        %p361 = pneg %p360
      $region42: #{tpu_custom_call.1} parent=5 // pred_check_branch
        %363 = sbr.rel (%p361) target = $region44
      $region43: #{tpu_custom_call.1} parent=5 // pred_region
        // Predicated region
        $region45: #{tpu_custom_call.1} parent=43 // pred_check
          %p364 = pneg %p47
        $region46: #{tpu_custom_call.1} parent=43 // pred_check_branch
          %366 = sbr.rel (%p364) target = $region48
        $region47: #{tpu_custom_call.1} parent=43 // pred_region
          %s367 = sand.u32 %s37, 1
          %s368 = scalar_lea.sflag [#allocation3], %s367
          %s369 = sand.u32 %s37, 1
          %s370 = smul.addr %s369, 8
          %s371 = scalar_lea.vmem [#allocation2], %s370
          %373 = vsyncadd %s368, 0
          %s374 = smul.addr %s27, 8
          %s375 = scalar_lea.hbm %s0, %s374
          %s377 = sshll.u32 %s375, 4
          %s378 = int_to_ptr.hbm [resolvable:$true] %s377
          %s379 = sshll.u32 %s371, 4
          %s380 = int_to_ptr.vmem [resolvable:$true] %s379
          %382 = dma.hbm_to_vmem [thread:$0]  %s378, 128, %s380, %s368
        $region48: #{tpu_custom_call.1} parent=43 // pred_fallthru
          _
        // Predicated region
        $region49: #{tpu_custom_call.1} parent=43 // pred_check
          %p383 = pneg %p73
        $region50: #{tpu_custom_call.1} parent=43 // pred_check_branch
          %385 = sbr.rel (%p383) target = $region52
        $region51: #{tpu_custom_call.1} parent=43 // pred_region
          %p386 = scmp.lt.s32.totalorder %s27, 1
          %s387 = scalar_select %p386, %s27, 1
          %s388 = smul.addr %s387, 2
          %s389 = smul.addr %s388, 8
          %s390 = scalar_lea.vmem %s1, %s389
        $region52: #{tpu_custom_call.1} parent=43 // pred_fallthru
          _
        // Predicated region
        $region53: #{tpu_custom_call.1} parent=43 // pred_check
          %p391 = pneg %p99
        $region54: #{tpu_custom_call.1} parent=43 // pred_check_branch
          %393 = sbr.rel (%p391) target = $region56
        $region55: #{tpu_custom_call.1} parent=43 // pred_region
          %s394 = sand.u32 %s27, 1
          %s395 = scalar_lea.sflag [#allocation6], %s394
          %s396 = sand.u32 %s89, 1
          %s397 = smul.addr %s396, 8
          %s398 = scalar_lea.vmem [#allocation5], %s397
          %400 = vsyncadd %s395, 0
          %s401 = smul.addr %s27, 8
          %s402 = scalar_lea.hbm %s2, %s401
          %s404 = sshll.u32 %s402, 4
          %s405 = int_to_ptr.hbm [resolvable:$true] %s404
          %s406 = sshll.u32 %s398, 4
          %s407 = int_to_ptr.vmem [resolvable:$true] %s406
          %409 = dma.hbm_to_vmem [thread:$0]  %s405, 128, %s407, %s395
        $region56: #{tpu_custom_call.1} parent=43 // pred_fallthru
          _
        // Predicated region
        $region57: #{tpu_custom_call.1} parent=43 // pred_check
          %p410 = pneg %p125
        $region58: #{tpu_custom_call.1} parent=43 // pred_check_branch
          %412 = sbr.rel (%p410) target = $region60
        $region59: #{tpu_custom_call.1} parent=43 // pred_region
          %s413 = sand.u32 %s27, 1
          %s414 = scalar_lea.sflag [#allocation6], %s413
          %s415 = sand.u32 %s115, 1
          %s416 = smul.addr %s415, 8
          %s417 = scalar_lea.vmem [#allocation7], %s416
          %419 = vsyncadd %s414, 0
          %s420 = smul.addr %s27, 8
          %s421 = scalar_lea.hbm %s3, %s420
          %s423 = sshll.u32 %s421, 4
          %s424 = int_to_ptr.hbm [resolvable:$true] %s423
          %s425 = sshll.u32 %s417, 4
          %s426 = int_to_ptr.vmem [resolvable:$true] %s425
          %428 = dma.hbm_to_vmem [thread:$0]  %s424, 128, %s426, %s414
        $region60: #{tpu_custom_call.1} parent=43 // pred_fallthru
          _
      $region44: #{tpu_custom_call.1} parent=5 // pred_fallthru
        _
      %p429 = scmp.le.s32.totalorder 1, %s27
      %p430 = scmp.lt.s32.totalorder %s27, 3
      %p431 = pnand %p429, %p430
      %p432 = pneg %p431
      // Predicated region
      $region61: #{tpu_custom_call.1} parent=5 // pred_check
        _
      $region62: #{tpu_custom_call.1} parent=5 // pred_check_branch
        %434 = sbr.rel (%p431) target = $region64
      $region63: #{tpu_custom_call.1} parent=5 // pred_region
        %s435 = ssub.s32 %s27, 1
        %s436 = sand.u32 %s40, 1
        %s437 = scalar_lea.sflag [#allocation3], %s436
        %s438 = sand.u32 %s40, 1
        %s439 = smul.addr %s438, 8
        %s440 = scalar_lea.vmem [#allocation2], %s439
        // Predicated region
        $region65: #{tpu_custom_call.1} parent=63 // pred_check
          %p441 = pneg %p53
        $region66: #{tpu_custom_call.1} parent=63 // pred_check_branch
          %443 = sbr.rel (%p441) target = $region68
        $region67: #{tpu_custom_call.1} parent=63 // pred_region
          %445 = dma.done %s437, 128
        $region68: #{tpu_custom_call.1} parent=63 // pred_fallthru
          _
        %s446 = sand.u32 %s32, 1
        %s447 = scalar_lea.sflag [#allocation6], %s446
        %s448 = sand.u32 %s92, 1
        %s449 = smul.addr %s448, 8
        %s450 = scalar_lea.vmem [#allocation5], %s449
        // Predicated region
        $region69: #{tpu_custom_call.1} parent=63 // pred_check
          %p451 = pneg %p105
        $region70: #{tpu_custom_call.1} parent=63 // pred_check_branch
          %453 = sbr.rel (%p451) target = $region72
        $region71: #{tpu_custom_call.1} parent=63 // pred_region
          %455 = dma.done %s447, 128
        $region72: #{tpu_custom_call.1} parent=63 // pred_fallthru
          _
        %s456 = sand.u32 %s32, 1
        %s457 = scalar_lea.sflag [#allocation6], %s456
        %s458 = sand.u32 %s118, 1
        %s459 = smul.addr %s458, 8
        %s460 = scalar_lea.vmem [#allocation7], %s459
        // Predicated region
        $region73: #{tpu_custom_call.1} parent=63 // pred_check
          %p461 = pneg %p131
        $region74: #{tpu_custom_call.1} parent=63 // pred_check_branch
          %463 = sbr.rel (%p461) target = $region76
        $region75: #{tpu_custom_call.1} parent=63 // pred_region
          %465 = dma.done %s457, 128
        $region76: #{tpu_custom_call.1} parent=63 // pred_fallthru
          _
        // Predicated region
        $region77: #{tpu_custom_call.1} parent=63 // pred_check
          %p466 = pneg %p215
        $region78: #{tpu_custom_call.1} parent=63 // pred_check_branch
          %468 = sbr.rel (%p466) target = $region80
        $region79: #{tpu_custom_call.1} parent=63 // pred_region
          %470 = dma.done [#allocation9], 512
        $region80: #{tpu_custom_call.1} parent=63 // pred_fallthru
          _
        // Predicated region
        $region81: #{tpu_custom_call.1} parent=63 // pred_check
          %p471 = pneg %p236
        $region82: #{tpu_custom_call.1} parent=63 // pred_check_branch
          %473 = sbr.rel (%p471) target = $region84
        $region83: #{tpu_custom_call.1} parent=63 // pred_region
          %475 = dma.done [#allocation9], 16
        $region84: #{tpu_custom_call.1} parent=63 // pred_fallthru
          _
        %s476 = sand.u32 %s40, 1
        %s477 = scalar_lea.sflag [#allocation3], %s476
        %s478 = sand.u32 %s40, 1
        %s479 = smul.addr %s478, 8
        %s480 = scalar_lea.vmem [#allocation2], %s479
        %p481 = pneg %p53
        %p482 = pneg %p50
        %p483 = scmp.lt.s32.totalorder %s32, 1
        %s484 = scalar_select %p483, %s32, 1
        %s485 = smul.addr %s484, 2
        %s486 = smul.addr %s485, 8
        %s487 = scalar_lea.vmem %s1, %s486
        %p488 = pneg %p79
        %p489 = pneg %p76
        %s490 = sand.u32 %s32, 1
        %s491 = scalar_lea.sflag [#allocation6], %s490
        %s492 = sand.u32 %s92, 1
        %s493 = smul.addr %s492, 8
        %s494 = scalar_lea.vmem [#allocation5], %s493
        %p495 = pneg %p105
        %p496 = pneg %p102
        %s497 = sand.u32 %s32, 1
        %s498 = scalar_lea.sflag [#allocation6], %s497
        %s499 = sand.u32 %s118, 1
        %s500 = smul.addr %s499, 8
        %s501 = scalar_lea.vmem [#allocation7], %s500
        %p502 = pneg %p131
        %p503 = pneg %p128
        %p504 = pneg %p152
        %p505 = pneg %p149
        %p506 = pneg %p173
        %p507 = pneg %p170
        %p508 = pneg %p194
        %p509 = pneg %p191
        %p510 = pneg %p215
        %p511 = pneg %p212
        %p512 = pneg %p236
        %p513 = pneg %p233
        %p514 = pneg %p257
        %p515 = pneg %p254
        %p516 = pneg %p278
        %p517 = pneg %p275
        %p518 = pneg %p304
        %p519 = pneg %p301
        %s520 = sand.u32 %s291, 1
        %s521 = scalar_lea.sflag [#allocation4], %s520
        %s522 = sand.u32 %s291, 1
        %s523 = smul.addr %s522, 8
        %s524 = scalar_lea.vmem [#allocation11], %s523
        %p525 = scmp.lt.s32.totalorder %s32, 1
        %s526 = scalar_select %p525, %s32, 1
        %s527 = smul.addr %s526, 2
        %s528 = smul.addr %s527, 8
        %s529 = scalar_lea.vmem %s1, %s528
        %v530 = vld [vmem:[%s440] sm:$0xff]
        %v531 = vld [vmem:[%s529] sm:$0xff]
        %v532 = vld [vmem:[%s529 + $0x8] sm:$0xff]
        %v533 = vld [vmem:[%s450] sm:$0xff]
        %v534 = vld [vmem:[%s460] sm:$0xff]
        %v535 = vld [vmem:[%s4] sm:$0xff]
        %v536 = vld [vmem:[%s4 + $0x8] sm:$0xff]
        %v537 = vld [vmem:[%s4 + $0x10] sm:$0xff]
        %v538 = vld [vmem:[%s4 + $0x18] sm:$0xff]
        %v539 = vld [vmem:[%s5] sm:$0x1]
        %v540 = vld [vmem:[%s6] sm:$0xff]
        %v541 = vld [vmem:[%s6 + $0x8] sm:$0xff]
        %v542 = vld [vmem:[%s6 + $0x10] sm:$0xff]
        %v543 = vld [vmem:[%s6 + $0x18] sm:$0xff]
        %v544 = vld [vmem:[#allocation8] sm:$0xff]
        %v545 = vld [vmem:[#allocation8 + $0x8] sm:$0xff]
        %v546 = vld [vmem:[#allocation8 + $0x10] sm:$0xff]
        %v547 = vld [vmem:[#allocation8 + $0x18] sm:$0xff]
        %v548 = vld [vmem:[#allocation10] sm:$0x1]
        %v549 = vld [vmem:[%s9] sm:$0xff]
        %v550 = vld [vmem:[%s9 + $0x8] sm:$0xff]
        %v551 = vld [vmem:[%s9 + $0x10] sm:$0xff]
        %v552 = vld [vmem:[%s9 + $0x18] sm:$0xff]
        %v553 = vld [vmem:[%s9 + $0x20] sm:$0xff]
        %v554 = vld [vmem:[%s9 + $0x28] sm:$0xff]
        %v555 = vld [vmem:[%s9 + $0x30] sm:$0xff]
        %v556 = vld [vmem:[%s9 + $0x38] sm:$0xff]
        %v557 = vld [vmem:[%s10] sm:$0x3f]
        %v559 = vperm.slane %v539, 0
        %vm561 = vcmask 261120
        %v563 = vsel %vm561, %v530, 0
        %565 = vmatpush.msra.mxu0 0.0
        %566 = vmatpush.msra.mxu0 0.0
        %567 = vmatpush.msra.mxu0 0.0
        %568 = vmatpush.msra.mxu0 0.0
        %569 = vmatpush.msra.mxu0 0.0
        %570 = vmatpush.msra.mxu0 0.0
        %571 = vmatpush.msra.mxu0 0.0
        %572 = vmatpush.msra.mxu0 0.0
        %573 = vmatpush.msra.mxu0 0.0
        %574 = vmatpush.msra.mxu0 0.0
        %575 = vmatpush.msra.mxu0 0.0
        %576 = vmatpush.msra.mxu0 0.0
        %577 = vmatpush.msra.mxu0 %v538
        %578 = vmatpush.msra.mxu0 %v537
        %579 = vmatpush.msra.mxu0 %v536
        %580 = vmatpush.msra.mxu0 %v535
        %581 = vmatmul.f32.gmra.mxu0 %v563
        %v582 = vpop.f32.mrf.mxu0
        %v583 = vadd.f32 %v559, %v582
        %584 = vdwg.mxu0
        %v585 = vmul.f32 %v583, 0.25
        %587 = vrot.lane.b32.xlu0 %v583, 96
        %v588 = vpop.permute.xlu0 %587
        %vm589 = vcmask 130048
        %v591 = vsel %vm589, %v585, 0
        %v593 = vsel %vm589, %v588, 0
        %595 = vmatpush.xpose.msra.mxu0 0.0
        %596 = vmatpush.xpose.msra.mxu0 0.0
        %597 = vmatpush.xpose.msra.mxu0 0.0
        %598 = vmatpush.xpose.msra.mxu0 0.0
        %599 = vmatpush.xpose.msra.mxu0 0.0
        %600 = vmatpush.xpose.msra.mxu0 0.0
        %601 = vmatpush.xpose.msra.mxu0 0.0
        %602 = vmatpush.xpose.msra.mxu0 0.0
        %603 = vmatpush.xpose.msra.mxu0 0.0
        %604 = vmatpush.xpose.msra.mxu0 0.0
        %605 = vmatpush.xpose.msra.mxu0 0.0
        %606 = vmatpush.xpose.msra.mxu0 0.0
        %607 = vmatpush.xpose.msra.mxu0 0.0
        %608 = vmatpush.xpose.msra.mxu0 0.0
        %609 = vmatpush.xpose.msra.mxu0 0.0
        %610 = vmatpush.xpose.msra.mxu0 %v593
        %611 = vmatmul.f32.gmra.mxu0 %v591
        %v612 = vpop.f32.mrf.mxu0
        %v613 = vadd.f32 0.0, %v612
        %614 = vdwg.mxu0
        %vm615 = vcmp.gt.f32.partialorder %v533, 0.5
        %v616 = vsel %vm615, -1e+09, %v613
        %vm617 = vcmask 64512
        %v618 = vsel %vm617, %v616, -inf
        %619 = vmax.xlane.f32.xlu0 %v618
        %v620 = vpop.xlane.xlu0 %619
        %v621 = vsub.f32 %v616, %v620
        %v622 = vmul.f32 %v621, 1.442695
        %v623 = vpow.pop %v622
        %v624 = vsel %vm617, %v623, 0.0
        %625 = vadd.xlane.f32.xlu0 %v624
        %v626 = vpop.xlane.xlu0 %625
        %v627 = vrcp.pop %v626
        %v628 = vmul.f32 %v626, %v627
        %v629 = vsub.f32 1.0, %v628
        %v630 = vmul.f32 %v627, %v629
        %v631 = vadd.f32 %v627, %v630
        %vm632 = vweird.f32 %v626
        %vm633 = vweird.f32 %v627
        %vm634 = vmor %vm632, %vm633
        %v635 = vsel %vm634, %v627, %v631
        %v636 = vand.u32 2147483647, %v626
        %vm637 = vcmp.eq.f32.partialorder %v636, 8.507059e+37
        %v638 = vand.u32 %v626, 2147483648
        %v639 = vor.u32 1.1754944e-38, %v638
        %v640 = vsel %vm637, %v639, %v635
        %v641 = vmul.f32 %v623, %v640
        %642 = vrot.lane.b32.xlu0 %v583, 64
        %v643 = vpop.permute.xlu0 %642
        %v646 = vsel %vm617, %v641, 0
        %648 = vmatpush.msra.mxu0 0.0
        %649 = vmatpush.msra.mxu0 0.0
        %650 = vmatpush.msra.mxu0 0.0
        %651 = vmatpush.msra.mxu0 0.0
        %652 = vmatpush.msra.mxu0 0.0
        %653 = vmatpush.msra.mxu0 0.0
        %654 = vmatpush.msra.mxu0 0.0
        %655 = vmatpush.msra.mxu0 0.0
        %656 = vmatpush.msra.mxu0 0.0
        %657 = vmatpush.msra.mxu0 0.0
        %658 = vmatpush.msra.mxu0 0.0
        %659 = vmatpush.msra.mxu0 0.0
        %660 = vmatpush.msra.mxu0 0.0
        %661 = vmatpush.msra.mxu0 0.0
        %662 = vmatpush.msra.mxu0 0.0
        %663 = vmatpush.msra.mxu0 %v643
        %664 = vmatmul.f32.gmra.mxu0 %v646
        %v665 = vpop.f32.mrf.mxu0
        %v666 = vadd.f32 0.0, %v665
        %667 = vdwg.mxu0
        %668 = vrot.lane.b32.xlu0 %v585, 112
        %v669 = vpop.permute.xlu0 %668
        %670 = vrot.lane.b32.xlu0 %v583, 80
        %v671 = vpop.permute.xlu0 %670
        %v672 = vsel %vm589, %v669, 0
        %v674 = vsel %vm589, %v671, 0
        %676 = vmatpush.xpose.msra.mxu0 0.0
        %677 = vmatpush.xpose.msra.mxu0 0.0
        %678 = vmatpush.xpose.msra.mxu0 0.0
        %679 = vmatpush.xpose.msra.mxu0 0.0
        %680 = vmatpush.xpose.msra.mxu0 0.0
        %681 = vmatpush.xpose.msra.mxu0 0.0
        %682 = vmatpush.xpose.msra.mxu0 0.0
        %683 = vmatpush.xpose.msra.mxu0 0.0
        %684 = vmatpush.xpose.msra.mxu0 0.0
        %685 = vmatpush.xpose.msra.mxu0 0.0
        %686 = vmatpush.xpose.msra.mxu0 0.0
        %687 = vmatpush.xpose.msra.mxu0 0.0
        %688 = vmatpush.xpose.msra.mxu0 0.0
        %689 = vmatpush.xpose.msra.mxu0 0.0
        %690 = vmatpush.xpose.msra.mxu0 0.0
        %691 = vmatpush.xpose.msra.mxu0 %v674
        %692 = vmatmul.f32.gmra.mxu0 %v672
        %v693 = vpop.f32.mrf.mxu0
        %v694 = vadd.f32 0.0, %v693
        %695 = vdwg.mxu0
        %v696 = vsel %vm615, -1e+09, %v694
        %v697 = vsel %vm617, %v696, -inf
        %698 = vmax.xlane.f32.xlu0 %v697
        %v699 = vpop.xlane.xlu0 %698
        %v700 = vsub.f32 %v696, %v699
        %v701 = vmul.f32 %v700, 1.442695
        %v702 = vpow.pop %v701
        %v703 = vsel %vm617, %v702, 0.0
        %704 = vadd.xlane.f32.xlu0 %v703
        %v705 = vpop.xlane.xlu0 %704
        %v706 = vrcp.pop %v705
        %v707 = vmul.f32 %v705, %v706
        %v708 = vsub.f32 1.0, %v707
        %v709 = vmul.f32 %v706, %v708
        %v710 = vadd.f32 %v706, %v709
        %vm711 = vweird.f32 %v705
        %vm712 = vweird.f32 %v706
        %vm713 = vmor %vm711, %vm712
        %v714 = vsel %vm713, %v706, %v710
        %v715 = vand.u32 2147483647, %v705
        %vm716 = vcmp.eq.f32.partialorder %v715, 8.507059e+37
        %v717 = vand.u32 %v705, 2147483648
        %v718 = vor.u32 1.1754944e-38, %v717
        %v719 = vsel %vm716, %v718, %v714
        %v720 = vmul.f32 %v702, %v719
        %721 = vrot.lane.b32.xlu0 %v583, 48
        %v722 = vpop.permute.xlu0 %721
        %v725 = vsel %vm617, %v720, 0
        %727 = vmatpush.msra.mxu0 0.0
        %728 = vmatpush.msra.mxu0 0.0
        %729 = vmatpush.msra.mxu0 0.0
        %730 = vmatpush.msra.mxu0 0.0
        %731 = vmatpush.msra.mxu0 0.0
        %732 = vmatpush.msra.mxu0 0.0
        %733 = vmatpush.msra.mxu0 0.0
        %734 = vmatpush.msra.mxu0 0.0
        %735 = vmatpush.msra.mxu0 0.0
        %736 = vmatpush.msra.mxu0 0.0
        %737 = vmatpush.msra.mxu0 0.0
        %738 = vmatpush.msra.mxu0 0.0
        %739 = vmatpush.msra.mxu0 0.0
        %740 = vmatpush.msra.mxu0 0.0
        %741 = vmatpush.msra.mxu0 0.0
        %742 = vmatpush.msra.mxu0 %v722
        %743 = vmatmul.f32.gmra.mxu0 %v725
        %v744 = vpop.f32.mrf.mxu0
        %v745 = vadd.f32 0.0, %v744
        %746 = vdwg.mxu0
        %748 = vrot.lane.b32.xlu0 %v745, 16
        %v749 = vpop.permute.xlu0 %748
        %v751 = vsel %vm589, %v666, %v749
        %v752 = vperm.slane %v557, 0
        %v754 = vsel %vm561, %v751, 0
        %756 = vmatpush.msra.mxu0 0.0
        %757 = vmatpush.msra.mxu0 0.0
        %758 = vmatpush.msra.mxu0 0.0
        %759 = vmatpush.msra.mxu0 0.0
        %760 = vmatpush.msra.mxu0 0.0
        %761 = vmatpush.msra.mxu0 0.0
        %762 = vmatpush.msra.mxu0 0.0
        %763 = vmatpush.msra.mxu0 0.0
        %764 = vmatpush.msra.mxu0 0.0
        %765 = vmatpush.msra.mxu0 0.0
        %766 = vmatpush.msra.mxu0 0.0
        %767 = vmatpush.msra.mxu0 0.0
        %768 = vmatpush.msra.mxu0 %v543
        %769 = vmatpush.msra.mxu0 %v542
        %770 = vmatpush.msra.mxu0 %v541
        %771 = vmatpush.msra.mxu0 %v540
        %772 = vmatmul.f32.gmra.mxu0 %v754
        %v773 = vpop.f32.mrf.mxu0
        %v774 = vadd.f32 %v752, %v773
        %775 = vdwg.mxu0
        %v776 = vadd.f32 %v530, %v774
        %v777 = vsel %vm561, %v776, 0.0
        %778 = vadd.xlane.f32.xlu0 %v777
        %v779 = vpop.xlane.xlu0 %778
        %v780 = vrcp.pop 32.0
        %v781 = vmul.f32 32.0, %v780
        %v782 = vsub.f32 1.0, %v781
        %v783 = vmul.f32 %v780, %v782
        %v784 = vadd.f32 %v780, %v783
        %vm785 = vweird.f32 %v780
        %v786 = vsel %vm785, %v780, %v784
        %v787 = vmul.f32 %v779, %v786
        %v788 = vsub.f32 %v776, %v787
        %v789 = vmul.f32 %v788, %v788
        %v790 = vsel %vm561, %v789, 0.0
        %791 = vadd.xlane.f32.xlu0 %v790
        %v792 = vpop.xlane.xlu0 %791
        %v793 = vmul.f32 %v792, %v786
        %v794 = vadd.f32 %v793, 1e-05
        %v795 = vrsqrt.pop %v794
        %v796 = vmul.f32 %v795, %v794
        %v797 = vmul.f32 %v796, %v795
        %v798 = vmul.f32 0.5, %v797
        %v799 = vsub.f32 1.5, %v798
        %v800 = vmul.f32 %v795, %v799
        %vm801 = vweird.f32 %v794
        %vm802 = vweird.f32 %v795
        %vm803 = vmor %vm801, %vm802
        %v804 = vsel %vm803, %v795, %v800
        %v805 = vmul.f32 %v788, %v804
        %v806 = vperm.slane %v557, 1
        %v807 = vmul.f32 %v805, %v806
        %v808 = vperm.slane %v557, 2
        %v809 = vadd.f32 %v807, %v808
        %v811 = vsel %vm561, %v809, 0
        %813 = vmatpush.msra.mxu0 0.0
        %814 = vmatpush.msra.mxu0 0.0
        %815 = vmatpush.msra.mxu0 0.0
        %816 = vmatpush.msra.mxu0 0.0
        %817 = vmatpush.msra.mxu0 0.0
        %818 = vmatpush.msra.mxu0 0.0
        %819 = vmatpush.msra.mxu0 0.0
        %820 = vmatpush.msra.mxu0 0.0
        %821 = vmatpush.msra.mxu0 0.0
        %822 = vmatpush.msra.mxu0 0.0
        %823 = vmatpush.msra.mxu0 0.0
        %824 = vmatpush.msra.mxu0 0.0
        %825 = vmatpush.msra.mxu0 %v538
        %826 = vmatpush.msra.mxu0 %v537
        %827 = vmatpush.msra.mxu0 %v536
        %828 = vmatpush.msra.mxu0 %v535
        %829 = vmatmul.f32.gmra.mxu0 %v811
        %v830 = vpop.f32.mrf.mxu0
        %v831 = vadd.f32 %v559, %v830
        %832 = vdwg.mxu0
        %v834 = vsel %vm561, %v531, 0
        %v837 = vsel %vm561, %v532, 0
        %839 = vmatpush.msra.mxu0 0.0
        %840 = vmatpush.msra.mxu0 0.0
        %841 = vmatpush.msra.mxu0 0.0
        %842 = vmatpush.msra.mxu0 0.0
        %843 = vmatpush.msra.mxu0 0.0
        %844 = vmatpush.msra.mxu0 0.0
        %845 = vmatpush.msra.mxu0 0.0
        %846 = vmatpush.msra.mxu0 0.0
        %847 = vmatpush.msra.mxu0 0.0
        %848 = vmatpush.msra.mxu0 0.0
        %849 = vmatpush.msra.mxu0 0.0
        %850 = vmatpush.msra.mxu0 0.0
        %851 = vmatpush.msra.mxu0 %v538
        %852 = vmatpush.msra.mxu0 %v537
        %853 = vmatpush.msra.mxu0 %v536
        %854 = vmatpush.msra.mxu0 %v535
        %855 = vmatmul.f32.gmra.mxu0 %v834
        %v856 = vpop.f32.mrf.mxu0
        %v857 = vadd.f32 %v559, %v856
        %858 = vmatmul.f32.gmra.mxu0 %v837
        %v859 = vpop.f32.mrf.mxu0
        %v860 = vadd.f32 %v559, %v859
        %861 = vdwg.mxu0
        %v862 = vmul.f32 %v831, 0.25
        %865 = vrot.lane.b32.xlu0 %v857, 96
        %v866 = vpop.permute.xlu0 %865
        %867 = vrot.lane.b32.xlu0 %v860, 96
        %v868 = vpop.permute.xlu0 %867
        %v870 = vsel %vm589, %v862, 0
        %v872 = vsel %vm589, %v866, 0
        %v874 = vsel %vm589, %v868, 0
        %876 = vmatpush.xpose.msra.mxu0 0.0
        %877 = vmatpush.xpose.msra.mxu0 0.0
        %878 = vmatpush.xpose.msra.mxu0 0.0
        %879 = vmatpush.xpose.msra.mxu0 0.0
        %880 = vmatpush.xpose.msra.mxu0 0.0
        %881 = vmatpush.xpose.msra.mxu0 0.0
        %882 = vmatpush.xpose.msra.mxu0 0.0
        %883 = vmatpush.xpose.msra.mxu0 0.0
        %884 = vmatpush.xpose.msra.mxu0 0.0
        %885 = vmatpush.xpose.msra.mxu0 0.0
        %886 = vmatpush.xpose.msra.mxu0 0.0
        %887 = vmatpush.xpose.msra.mxu0 0.0
        %888 = vmatpush.xpose.msra.mxu0 0.0
        %889 = vmatpush.xpose.msra.mxu0 0.0
        %890 = vmatpush.xpose.msra.mxu0 %v874
        %891 = vmatpush.xpose.msra.mxu0 %v872
        %892 = vmatmul.f32.gmra.mxu0 %v870
        %v893 = vpop.f32.mrf.mxu0
        %v894 = vadd.f32 0.0, %v893
        %895 = vdwg.mxu0
        %vm896 = vcmp.gt.f32.partialorder %v534, 0.5
        %v897 = vsel %vm896, -1e+09, %v894
        %v898 = vsel %vm589, %v897, -inf
        %899 = vmax.xlane.f32.xlu0 %v898
        %v900 = vpop.xlane.xlu0 %899
        %v901 = vsub.f32 %v897, %v900
        %v902 = vmul.f32 %v901, 1.442695
        %v903 = vpow.pop %v902
        %v904 = vsel %vm589, %v903, 0.0
        %905 = vadd.xlane.f32.xlu0 %v904
        %v906 = vpop.xlane.xlu0 %905
        %v907 = vrcp.pop %v906
        %v908 = vmul.f32 %v906, %v907
        %v909 = vsub.f32 1.0, %v908
        %v910 = vmul.f32 %v907, %v909
        %v911 = vadd.f32 %v907, %v910
        %vm912 = vweird.f32 %v906
        %vm913 = vweird.f32 %v907
        %vm914 = vmor %vm912, %vm913
        %v915 = vsel %vm914, %v907, %v911
        %v916 = vand.u32 2147483647, %v906
        %vm917 = vcmp.eq.f32.partialorder %v916, 8.507059e+37
        %v918 = vand.u32 %v906, 2147483648
        %v919 = vor.u32 1.1754944e-38, %v918
        %v920 = vsel %vm917, %v919, %v915
        %v921 = vmul.f32 %v903, %v920
        %922 = vrot.lane.b32.xlu0 %v857, 64
        %v923 = vpop.permute.xlu0 %922
        %924 = vrot.lane.b32.xlu0 %v860, 64
        %v925 = vpop.permute.xlu0 %924
        %v929 = vsel %vm589, %v921, 0
        %931 = vmatpush.msra.mxu0 0.0
        %932 = vmatpush.msra.mxu0 0.0
        %933 = vmatpush.msra.mxu0 0.0
        %934 = vmatpush.msra.mxu0 0.0
        %935 = vmatpush.msra.mxu0 0.0
        %936 = vmatpush.msra.mxu0 0.0
        %937 = vmatpush.msra.mxu0 0.0
        %938 = vmatpush.msra.mxu0 0.0
        %939 = vmatpush.msra.mxu0 0.0
        %940 = vmatpush.msra.mxu0 0.0
        %941 = vmatpush.msra.mxu0 0.0
        %942 = vmatpush.msra.mxu0 0.0
        %943 = vmatpush.msra.mxu0 0.0
        %944 = vmatpush.msra.mxu0 0.0
        %945 = vmatpush.msra.mxu0 %v925
        %946 = vmatpush.msra.mxu0 %v923
        %947 = vmatmul.f32.gmra.mxu0 %v929
        %v948 = vpop.f32.mrf.mxu0
        %v949 = vadd.f32 0.0, %v948
        %950 = vdwg.mxu0
        %951 = vrot.lane.b32.xlu0 %v862, 112
        %v952 = vpop.permute.xlu0 %951
        %953 = vrot.lane.b32.xlu0 %v857, 80
        %v954 = vpop.permute.xlu0 %953
        %955 = vrot.lane.b32.xlu0 %v860, 80
        %v956 = vpop.permute.xlu0 %955
        %v957 = vsel %vm589, %v952, 0
        %v959 = vsel %vm589, %v954, 0
        %v961 = vsel %vm589, %v956, 0
        %963 = vmatpush.xpose.msra.mxu0 0.0
        %964 = vmatpush.xpose.msra.mxu0 0.0
        %965 = vmatpush.xpose.msra.mxu0 0.0
        %966 = vmatpush.xpose.msra.mxu0 0.0
        %967 = vmatpush.xpose.msra.mxu0 0.0
        %968 = vmatpush.xpose.msra.mxu0 0.0
        %969 = vmatpush.xpose.msra.mxu0 0.0
        %970 = vmatpush.xpose.msra.mxu0 0.0
        %971 = vmatpush.xpose.msra.mxu0 0.0
        %972 = vmatpush.xpose.msra.mxu0 0.0
        %973 = vmatpush.xpose.msra.mxu0 0.0
        %974 = vmatpush.xpose.msra.mxu0 0.0
        %975 = vmatpush.xpose.msra.mxu0 0.0
        %976 = vmatpush.xpose.msra.mxu0 0.0
        %977 = vmatpush.xpose.msra.mxu0 %v961
        %978 = vmatpush.xpose.msra.mxu0 %v959
        %979 = vmatmul.f32.gmra.mxu0 %v957
        %v980 = vpop.f32.mrf.mxu0
        %v981 = vadd.f32 0.0, %v980
        %982 = vdwg.mxu0
        %v983 = vsel %vm896, -1e+09, %v981
        %v984 = vsel %vm589, %v983, -inf
        %985 = vmax.xlane.f32.xlu0 %v984
        %v986 = vpop.xlane.xlu0 %985
        %v987 = vsub.f32 %v983, %v986
        %v988 = vmul.f32 %v987, 1.442695
        %v989 = vpow.pop %v988
        %v990 = vsel %vm589, %v989, 0.0
        %991 = vadd.xlane.f32.xlu0 %v990
        %v992 = vpop.xlane.xlu0 %991
        %v993 = vrcp.pop %v992
        %v994 = vmul.f32 %v992, %v993
        %v995 = vsub.f32 1.0, %v994
        %v996 = vmul.f32 %v993, %v995
        %v997 = vadd.f32 %v993, %v996
        %vm998 = vweird.f32 %v992
        %vm999 = vweird.f32 %v993
        %vm1000 = vmor %vm998, %vm999
        %v1001 = vsel %vm1000, %v993, %v997
        %v1002 = vand.u32 2147483647, %v992
        %vm1003 = vcmp.eq.f32.partialorder %v1002, 8.507059e+37
        %v1004 = vand.u32 %v992, 2147483648
        %v1005 = vor.u32 1.1754944e-38, %v1004
        %v1006 = vsel %vm1003, %v1005, %v1001
        %v1007 = vmul.f32 %v989, %v1006
        %1008 = vrot.lane.b32.xlu0 %v857, 48
        %v1009 = vpop.permute.xlu0 %1008
        %1010 = vrot.lane.b32.xlu0 %v860, 48
        %v1011 = vpop.permute.xlu0 %1010
        %v1015 = vsel %vm589, %v1007, 0
        %1017 = vmatpush.msra.mxu0 0.0
        %1018 = vmatpush.msra.mxu0 0.0
        %1019 = vmatpush.msra.mxu0 0.0
        %1020 = vmatpush.msra.mxu0 0.0
        %1021 = vmatpush.msra.mxu0 0.0
        %1022 = vmatpush.msra.mxu0 0.0
        %1023 = vmatpush.msra.mxu0 0.0
        %1024 = vmatpush.msra.mxu0 0.0
        %1025 = vmatpush.msra.mxu0 0.0
        %1026 = vmatpush.msra.mxu0 0.0
        %1027 = vmatpush.msra.mxu0 0.0
        %1028 = vmatpush.msra.mxu0 0.0
        %1029 = vmatpush.msra.mxu0 0.0
        %1030 = vmatpush.msra.mxu0 0.0
        %1031 = vmatpush.msra.mxu0 %v1011
        %1032 = vmatpush.msra.mxu0 %v1009
        %1033 = vmatmul.f32.gmra.mxu0 %v1015
        %v1034 = vpop.f32.mrf.mxu0
        %v1035 = vadd.f32 0.0, %v1034
        %1036 = vdwg.mxu0
        %1038 = vrot.lane.b32.xlu0 %v1035, 16
        %v1039 = vpop.permute.xlu0 %1038
        %v1041 = vsel %vm589, %v949, %v1039
        %v1043 = vsel %vm561, %v1041, 0
        %1045 = vmatpush.msra.mxu0 0.0
        %1046 = vmatpush.msra.mxu0 0.0
        %1047 = vmatpush.msra.mxu0 0.0
        %1048 = vmatpush.msra.mxu0 0.0
        %1049 = vmatpush.msra.mxu0 0.0
        %1050 = vmatpush.msra.mxu0 0.0
        %1051 = vmatpush.msra.mxu0 0.0
        %1052 = vmatpush.msra.mxu0 0.0
        %1053 = vmatpush.msra.mxu0 0.0
        %1054 = vmatpush.msra.mxu0 0.0
        %1055 = vmatpush.msra.mxu0 0.0
        %1056 = vmatpush.msra.mxu0 0.0
        %1057 = vmatpush.msra.mxu0 %v543
        %1058 = vmatpush.msra.mxu0 %v542
        %1059 = vmatpush.msra.mxu0 %v541
        %1060 = vmatpush.msra.mxu0 %v540
        %1061 = vmatmul.f32.gmra.mxu0 %v1043
        %v1062 = vpop.f32.mrf.mxu0
        %v1063 = vadd.f32 %v752, %v1062
        %1064 = vdwg.mxu0
        %v1065 = vadd.f32 %v809, %v1063
        %v1066 = vsel %vm561, %v1065, 0.0
        %1067 = vadd.xlane.f32.xlu0 %v1066
        %v1068 = vpop.xlane.xlu0 %1067
        %v1069 = vmul.f32 %v1068, %v786
        %v1070 = vsub.f32 %v1065, %v1069
        %v1071 = vmul.f32 %v1070, %v1070
        %v1072 = vsel %vm561, %v1071, 0.0
        %1073 = vadd.xlane.f32.xlu0 %v1072
        %v1074 = vpop.xlane.xlu0 %1073
        %v1075 = vmul.f32 %v1074, %v786
        %v1076 = vadd.f32 %v1075, 1e-05
        %v1077 = vrsqrt.pop %v1076
        %v1078 = vmul.f32 %v1077, %v1076
        %v1079 = vmul.f32 %v1078, %v1077
        %v1080 = vmul.f32 0.5, %v1079
        %v1081 = vsub.f32 1.5, %v1080
        %v1082 = vmul.f32 %v1077, %v1081
        %vm1083 = vweird.f32 %v1076
        %vm1084 = vweird.f32 %v1077
        %vm1085 = vmor %vm1083, %vm1084
        %v1086 = vsel %vm1085, %v1077, %v1082
        %v1087 = vmul.f32 %v1070, %v1086
        %v1088 = vmul.f32 %v1087, %v806
        %v1089 = vadd.f32 %v1088, %v808
        %v1091 = vperm.slane %v548, 0
        %v1094 = vsel %vm561, %v1089, 0
        %1096 = vmatpush.msra.mxu0 0.0
        %1097 = vmatpush.msra.mxu0 0.0
        %1098 = vmatpush.msra.mxu0 0.0
        %1099 = vmatpush.msra.mxu0 0.0
        %1100 = vmatpush.msra.mxu0 0.0
        %1101 = vmatpush.msra.mxu0 0.0
        %1102 = vmatpush.msra.mxu0 0.0
        %1103 = vmatpush.msra.mxu0 0.0
        %1104 = vmatpush.msra.mxu0 0.0
        %1105 = vmatpush.msra.mxu0 0.0
        %1106 = vmatpush.msra.mxu0 0.0
        %1107 = vmatpush.msra.mxu0 0.0
        %1108 = vmatpush.msra.mxu0 %v547
        %1109 = vmatpush.msra.mxu0 %v546
        %1110 = vmatpush.msra.mxu0 %v545
        %1111 = vmatpush.msra.mxu0 %v544
        %1112 = vmatmul.f32.gmra.mxu0 %v1094
        %v1113 = vpop.f32.mrf.mxu0
        %v1114 = vadd.f32 %v1091, %v1113
        %1115 = vdwg.mxu0
        %v1116 = vmax.f32 %v1114, 0.0
        %v1117 = vperm.slane %v557, 3
        %vm1118 = vcmask 523264
        %v1120 = vsel %vm1118, %v1116, 0
        %1122 = vmatpush.msra.mxu0 0.0
        %1123 = vmatpush.msra.mxu0 0.0
        %1124 = vmatpush.msra.mxu0 0.0
        %1125 = vmatpush.msra.mxu0 0.0
        %1126 = vmatpush.msra.mxu0 0.0
        %1127 = vmatpush.msra.mxu0 0.0
        %1128 = vmatpush.msra.mxu0 0.0
        %1129 = vmatpush.msra.mxu0 0.0
        %1130 = vmatpush.msra.mxu0 %v556
        %1131 = vmatpush.msra.mxu0 %v555
        %1132 = vmatpush.msra.mxu0 %v554
        %1133 = vmatpush.msra.mxu0 %v553
        %1134 = vmatpush.msra.mxu0 %v552
        %1135 = vmatpush.msra.mxu0 %v551
        %1136 = vmatpush.msra.mxu0 %v550
        %1137 = vmatpush.msra.mxu0 %v549
        %1138 = vmatmul.f32.gmra.mxu0 %v1120
        %v1139 = vpop.f32.mrf.mxu0
        %v1140 = vadd.f32 %v1117, %v1139
        %1141 = vdwg.mxu0
        %v1142 = vadd.f32 %v1089, %v1140
        %v1143 = vsel %vm561, %v1142, 0.0
        %1144 = vadd.xlane.f32.xlu0 %v1143
        %v1145 = vpop.xlane.xlu0 %1144
        %v1146 = vmul.f32 %v1145, %v786
        %v1147 = vsub.f32 %v1142, %v1146
        %v1148 = vmul.f32 %v1147, %v1147
        %v1149 = vsel %vm561, %v1148, 0.0
        %1150 = vadd.xlane.f32.xlu0 %v1149
        %v1151 = vpop.xlane.xlu0 %1150
        %v1152 = vmul.f32 %v1151, %v786
        %v1153 = vadd.f32 %v1152, 1e-05
        %v1154 = vrsqrt.pop %v1153
        %v1155 = vmul.f32 %v1154, %v1153
        %v1156 = vmul.f32 %v1155, %v1154
        %v1157 = vmul.f32 0.5, %v1156
        %v1158 = vsub.f32 1.5, %v1157
        %v1159 = vmul.f32 %v1154, %v1158
        %vm1160 = vweird.f32 %v1153
        %vm1161 = vweird.f32 %v1154
        %vm1162 = vmor %vm1160, %vm1161
        %v1163 = vsel %vm1162, %v1154, %v1159
        %v1164 = vmul.f32 %v1147, %v1163
        %v1165 = vperm.slane %v557, 4
        %v1166 = vmul.f32 %v1164, %v1165
        %v1167 = vperm.slane %v557, 5
        %v1168 = vadd.f32 %v1166, %v1167
        %1169 = vst.msk [vmem:[%s524] sm:$0xff] %vm561, %v1168
        %s1170 = sand.u32 %s291, 1
        %s1171 = scalar_lea.sflag [#allocation4], %s1170
        %s1172 = sand.u32 %s291, 1
        %s1173 = smul.addr %s1172, 8
        %s1174 = scalar_lea.vmem [#allocation11], %s1173
        // Predicated region
        $region85: #{tpu_custom_call.1} parent=63 // pred_check
          %p1175 = pneg %p301
        $region86: #{tpu_custom_call.1} parent=63 // pred_check_branch
          %1177 = sbr.rel (%p1175) target = $region88
        $region87: #{tpu_custom_call.1} parent=63 // pred_region
          %1179 = vsyncadd %s1171, 0
          %s1180 = smul.addr %s32, 8
          %s1181 = scalar_lea.hbm %s11, %s1180
          %s1183 = sshll.u32 %s1174, 4
          %s1184 = int_to_ptr.vmem [resolvable:$true] %s1183
          %s1185 = sshll.u32 %s1181, 4
          %s1186 = int_to_ptr.hbm [resolvable:$true] %s1185
          %1188 = dma.vmem_to_hbm [thread:$0]  %s1184, 128, %s1186, %s1171
        $region88: #{tpu_custom_call.1} parent=63 // pred_fallthru
          _
      $region64: #{tpu_custom_call.1} parent=5 // pred_fallthru
        _
      %p1189 = scmp.le.s32.totalorder 2, %s27
      // Predicated region
      $region89: #{tpu_custom_call.1} parent=5 // pred_check
        %p1190 = pneg %p1189
      $region90: #{tpu_custom_call.1} parent=5 // pred_check_branch
        %1192 = sbr.rel (%p1190) target = $region92
      $region91: #{tpu_custom_call.1} parent=5 // pred_region
        %s1193 = ssub.s32 %s27, 2
        // Predicated region
        $region93: #{tpu_custom_call.1} parent=91 // pred_check
          %p1194 = pneg %p307
        $region94: #{tpu_custom_call.1} parent=91 // pred_check_branch
          %1196 = sbr.rel (%p1194) target = $region96
        $region95: #{tpu_custom_call.1} parent=91 // pred_region
          %s1197 = sand.u32 %s292, 1
          %s1198 = scalar_lea.sflag [#allocation4], %s1197
          %s1199 = sand.u32 %s292, 1
          %s1200 = smul.addr %s1199, 8
          %s1201 = scalar_lea.vmem [#allocation11], %s1200
          %1203 = dma.done %s1198, 128
        $region96: #{tpu_custom_call.1} parent=91 // pred_fallthru
          _
      $region92: #{tpu_custom_call.1} parent=5 // pred_fallthru
        _
    $region6: #{tpu_custom_call.1} parent=1 // loop_footer
      %s31 = sadd.s32 1, %s27
    $region7: #{tpu_custom_call.1} parent=1 // loop_footer_branch
      %26 = sbr.rel target = $region3
    $region8: #{tpu_custom_call.1} parent=1 // loop_exit
      _
    %1204 = vsyncpa [#allocation3], 1
    %s1205 = scalar_lea.sflag [#allocation3], 1
    %1206 = vsyncpa %s1205, 1
    %1207 = vsyncpa [#allocation6], 1
    %s1208 = scalar_lea.sflag [#allocation6], 1
    %1209 = vsyncpa %s1208, 1
    %1210 = vsyncpa [#allocation9], 1
    %1211 = vsyncpa [#allocation4], 1
    %s1212 = scalar_lea.sflag [#allocation4], 1
    %1213 = vsyncpa %s1212, 1

</llo_original>
